<compile_context>
chip_gen: v6e
topology: v6e:2x2x1
jax: 0.10.0
libtpu: 0.0.40
codegen_flags: <defaults>
</compile_context>

<pallas_src>
import jax
import jax.numpy as jnp
from jax import lax
from jax.experimental import pallas as pl
from jax.experimental.pallas import tpu as pltpu


def _leaky_relu(v, slope=0.2):
    # max(v, slope*v) == leaky_relu(v, slope) for slope < 1; mul+max (2 VALU ops).
    return jnp.maximum(v, slope * v)


def wgan_disc_kernel(x_ref,
                     w1_ref, b1_ref,
                     w2_ref, b2_ref,
                     w3_ref, b3_ref,
                     w4t_ref, b4_ref,
                     o_ref):
    # x arrives f32 (or bf16); cast in-kernel so the wrapper never spends a
    # separate HBM pass on a dtype change.
    x = x_ref[...].astype(jnp.bfloat16)
    h = jnp.dot(x, w1_ref[...], preferred_element_type=jnp.float32) + b1_ref[...]
    h = _leaky_relu(h)
    h = jnp.dot(h.astype(jnp.bfloat16), w2_ref[...],
                preferred_element_type=jnp.float32) + b2_ref[...]
    h = _leaky_relu(h)
    h = jnp.dot(h.astype(jnp.bfloat16), w3_ref[...],
                preferred_element_type=jnp.float32) + b3_ref[...]
    h = _leaky_relu(h)
    # fc4 (out_features == 1): w4 (1,128) contracted with h (tb,128) on the
    # feature axis -> (1, tb). The per-tile result is lane-dense (unmasked vst)
    # instead of a (tb, 1) column with only lane 0 live.
    row = lax.dot_general(
        w4t_ref[...], h.astype(jnp.bfloat16),
        dimension_numbers=(((1,), (1,)), ((), ())),
        preferred_element_type=jnp.float32)                 # (1, tb)
    row = row + b4_ref[...]                                 # (1,1) broadcast
    o_ref[...] = row.reshape(o_ref.shape).astype(o_ref.dtype)


def _round_up(n, m):
    return (n + m - 1) // m * m


def _vmem_bytes(tb, d_in, weight_bufs):
    """Rough VMEM footprint estimate for the chosen tiling."""
    x_tile = tb * d_in * 4 * 2                                  # f32 x tile, double-buffered
    w = weight_bufs * 2 * (d_in * 512 + 512 * 256 + 256 * 128 + 128)   # bf16 weights
    bias = weight_bufs * 4 * (512 + 256 + 128 + 1)              # f32 biases
    acts = tb * (512 + 256 + 128) * 4                           # f32 intermediates
    out = tb * 4 * 2                                            # f32 output row, double-buffered
    return x_tile + w + bias + acts + out + (2 << 20)           # + compiler scratch slack


def wgan_discriminator(x, params, *, tile_b=1024):
    """Forward of WGAN_Discriminator: x.view(B,-1) -> fc1..fc4, leaky_relu(0.2)
    between layers. x may be any shape [B, ...] (f32 or bf16)."""
    b = x.shape[0]
    x2d = x.reshape(b, -1)                       # metadata-only for contiguous x
    if x2d.dtype not in (jnp.float32, jnp.bfloat16):
        x2d = x2d.astype(jnp.float32)
    d_in = x2d.shape[1]
    (w1, b1), (w2, b2), (w3, b3), (w4, b4) = params
    w4t = w4.reshape(1, -1)                      # (1, 128) for the w4 @ h^T form
    b4r = b4.reshape(1, 1).astype(jnp.float32)

    # ---- batch tiling --------------------------------------------------------
    if b >= 256:
        # >= 2 grid steps so both v7x TensorCores get work; up to tile_b rows
        # per step to amortize the fixed per-grid-step overhead.
        tb = int(min(tile_b, _round_up((b + 1) // 2, 128)))
    else:
        # small batch: single tile, padded to bf16 sublane packing (16 rows).
        tb = int(max(16, _round_up(b, 16)))

    # ---- derived VMEM budget (v7x: 64 MiB physical, 32 MiB scoped default) ---
    vmem_cap = 32 * 1024 * 1024
    weight_bufs = 2                              # BlockSpec default double-buffering
    budget = _vmem_bytes(tb, d_in, weight_bufs)
    if budget > vmem_cap:
        weight_bufs = 1                          # constant weights -> single buffer
        budget = _vmem_bytes(tb, d_in, weight_bufs)
    while budget > vmem_cap and tb > 128:
        tb = max(128, tb // 2)
        budget = _vmem_bytes(tb, d_in, weight_bufs)
    vmem_limit = int(min(vmem_cap, max(budget + (6 << 20), 16 << 20)))

    b_pad = _round_up(b, tb)
    if b_pad != b:
        x2d = jnp.pad(x2d, ((0, b_pad - b), (0, 0)))
    num_tiles = b_pad // tb

    const2 = lambda i: (0, 0)
    wkw = {"pipeline_mode": pl.Buffered(1)} if weight_bufs == 1 else {}
    wspec = lambda shp: pl.BlockSpec(shp, const2, **wkw)

    out = pl.pallas_call(
        wgan_disc_kernel,
        out_shape=jax.ShapeDtypeStruct((num_tiles, 1, tb), jnp.float32),
        grid=(num_tiles,),
        in_specs=[
            pl.BlockSpec((tb, d_in), lambda i: (i, 0)),           # x tile (double-buffered)
            wspec(w1.shape), wspec(b1.shape),
            wspec(w2.shape), wspec(b2.shape),
            wspec(w3.shape), wspec(b3.shape),
            wspec(w4t.shape), wspec(b4r.shape),
        ],
        out_specs=pl.BlockSpec((1, 1, tb), lambda i: (i, 0, 0)),  # lane-dense row per tile
        compiler_params=pltpu.CompilerParams(
            dimension_semantics=("parallel",),                    # v7x: 2 TCs split batch tiles
            vmem_limit_bytes=vmem_limit,
        ),
    )(x2d, w1, b1, w2, b2, w3, b3, w4t, b4r)
    return out.reshape(b_pad, 1)[:b]


def init_params(key, d_input_dim):
    """PyTorch nn.Linear default init (U[-1/sqrt(in), 1/sqrt(in)]).
    Weights stored transposed vs torch ([in, out]) in bf16; biases in f32."""
    dims = [(d_input_dim, 512), (512, 256), (256, 128), (128, 1)]
    params = []
    for (din, dout) in dims:
        key, kw, kb = jax.random.split(key, 3)
        bound = 1.0 / jnp.sqrt(jnp.float32(din))
        w = jax.random.uniform(kw, (din, dout), jnp.float32, -bound, bound)
        bias = jax.random.uniform(kb, (1, dout), jnp.float32, -bound, bound)
        params.append((w.astype(jnp.bfloat16), bias.astype(jnp.float32)))
    return params


def reference_forward(x, params):
    """Pure-JAX reference mirroring the kernel's dtype policy (bf16 matmul
    operands, f32 accumulation / epilogue)."""
    b = x.shape[0]
    (w1, b1), (w2, b2), (w3, b3), (w4, b4) = params
    f32 = jnp.float32
    h = x.reshape(b, -1).astype(jnp.bfloat16)
    h = jax.nn.leaky_relu(jnp.dot(h, w1, preferred_element_type=f32) + b1, 0.2)
    h = jax.nn.leaky_relu(
        jnp.dot(h.astype(jnp.bfloat16), w2, preferred_element_type=f32) + b2, 0.2)
    h = jax.nn.leaky_relu(
        jnp.dot(h.astype(jnp.bfloat16), w3, preferred_element_type=f32) + b3, 0.2)
    return jnp.dot(h.astype(jnp.bfloat16), w4, preferred_element_type=f32) \
        + b4.reshape(1, 1)


if __name__ == "__main__":
    key = jax.random.PRNGKey(0)
    k_x, k_p = jax.random.split(key)

    # Small input consistent with the module: NCHW image flattened inside forward.
    B, C, H, W = 2, 4, 16, 16          # d_input_dim = 4*16*16 = 1024
    d_input_dim = C * H * W
    x = jax.random.normal(k_x, (B, C, H, W), jnp.float32)

    params = init_params(k_p, d_input_dim)

    out = wgan_discriminator(x, params)
    out = jax.block_until_ready(out)

    ref = reference_forward(x, params)
    assert out.shape == (B, 1)
    assert jnp.allclose(out, ref, atol=1e-3, rtol=1e-3), (out, ref)

    print("KERNEL_OK")
</pallas_src>

<mosaic_0001>
module attributes {stable_mosaic.version = 11 : i64} {
  func.func @wgan_disc_kernel(%arg0: i32, %arg1: memref<16x1024xf32, #tpu.memory_space<vmem>>, %arg2: memref<1024x512xbf16, #tpu.memory_space<vmem>>, %arg3: memref<1x512xf32, #tpu.memory_space<vmem>>, %arg4: memref<512x256xbf16, #tpu.memory_space<vmem>>, %arg5: memref<1x256xf32, #tpu.memory_space<vmem>>, %arg6: memref<256x128xbf16, #tpu.memory_space<vmem>>, %arg7: memref<1x128xf32, #tpu.memory_space<vmem>>, %arg8: memref<1x128xbf16, #tpu.memory_space<vmem>>, %arg9: memref<1x1xf32, #tpu.memory_space<vmem>>, %arg10: memref<1x1x16xf32, #tpu.memory_space<vmem>>) attributes {dimension_semantics = [#tpu.dimension_semantics<parallel>], iteration_bounds = array<i64: 1>, scalar_prefetch = 0 : i64, scratch_operands = 0 : i64, tpu.core_type = #tpu.core_type<tc>, window_params = [{transform_indices = @transform_0, window_bounds = array<i64: 16, 1024>}, {pipeline_mode = #tpu.pipeline_mode<synchronous>, transform_indices = @transform_1, window_bounds = array<i64: 1024, 512>}, {pipeline_mode = #tpu.pipeline_mode<synchronous>, transform_indices = @transform_2, window_bounds = array<i64: 1, 512>}, {pipeline_mode = #tpu.pipeline_mode<synchronous>, transform_indices = @transform_3, window_bounds = array<i64: 512, 256>}, {pipeline_mode = #tpu.pipeline_mode<synchronous>, transform_indices = @transform_4, window_bounds = array<i64: 1, 256>}, {pipeline_mode = #tpu.pipeline_mode<synchronous>, transform_indices = @transform_5, window_bounds = array<i64: 256, 128>}, {pipeline_mode = #tpu.pipeline_mode<synchronous>, transform_indices = @transform_6, window_bounds = array<i64: 1, 128>}, {pipeline_mode = #tpu.pipeline_mode<synchronous>, transform_indices = @transform_7, window_bounds = array<i64: 1, 128>}, {pipeline_mode = #tpu.pipeline_mode<synchronous>, transform_indices = @transform_8, window_bounds = array<i64: 1, 1>}, {transform_indices = @transform_9, window_bounds = array<i64: 1, 1, 16>}]} {
    %c0 = arith.constant 0 : index
    %c0_0 = arith.constant 0 : index
    %0 = vector.load %arg1[%c0, %c0_0] : memref<16x1024xf32, #tpu.memory_space<vmem>>, vector<16x1024xf32>
    %1 = arith.truncf %0 : vector<16x1024xf32> to vector<16x1024xbf16>
    %c0_1 = arith.constant 0 : index
    %c0_2 = arith.constant 0 : index
    %2 = vector.load %arg2[%c0_1, %c0_2] : memref<1024x512xbf16, #tpu.memory_space<vmem>>, vector<1024x512xbf16>
    %cst = arith.constant dense<0.000000e+00> : vector<16x512xf32>
    %3 = tpu.matmul %1, %2, %cst {dimension_numbers = #tpu.dot_dimension_numbers<[1], [0], [0], [1], [0, 0, 1, 1], [], []>} : vector<16x1024xbf16>, vector<1024x512xbf16>, vector<16x512xf32> -> vector<16x512xf32>
    %c0_3 = arith.constant 0 : index
    %c0_4 = arith.constant 0 : index
    %4 = vector.load %arg3[%c0_3, %c0_4] : memref<1x512xf32, #tpu.memory_space<vmem>>, vector<1x512xf32>
    %5 = vector.broadcast %4 : vector<1x512xf32> to vector<16x512xf32>
    %6 = arith.addf %3, %5 : vector<16x512xf32>
    %cst_5 = arith.constant 2.000000e-01 : f32
    %7 = vector.broadcast %cst_5 : f32 to vector<16x512xf32>
    %8 = arith.mulf %7, %6 : vector<16x512xf32>
    %9 = arith.maximumf %6, %8 : vector<16x512xf32>
    %10 = arith.truncf %9 : vector<16x512xf32> to vector<16x512xbf16>
    %c0_6 = arith.constant 0 : index
    %c0_7 = arith.constant 0 : index
    %11 = vector.load %arg4[%c0_6, %c0_7] : memref<512x256xbf16, #tpu.memory_space<vmem>>, vector<512x256xbf16>
    %cst_8 = arith.constant dense<0.000000e+00> : vector<16x256xf32>
    %12 = tpu.matmul %10, %11, %cst_8 {dimension_numbers = #tpu.dot_dimension_numbers<[1], [0], [0], [1], [0, 0, 1, 1], [], []>} : vector<16x512xbf16>, vector<512x256xbf16>, vector<16x256xf32> -> vector<16x256xf32>
    %c0_9 = arith.constant 0 : index
    %c0_10 = arith.constant 0 : index
    %13 = vector.load %arg5[%c0_9, %c0_10] : memref<1x256xf32, #tpu.memory_space<vmem>>, vector<1x256xf32>
    %14 = vector.broadcast %13 : vector<1x256xf32> to vector<16x256xf32>
    %15 = arith.addf %12, %14 : vector<16x256xf32>
    %cst_11 = arith.constant 2.000000e-01 : f32
    %16 = vector.broadcast %cst_11 : f32 to vector<16x256xf32>
    %17 = arith.mulf %16, %15 : vector<16x256xf32>
    %18 = arith.maximumf %15, %17 : vector<16x256xf32>
    %19 = arith.truncf %18 : vector<16x256xf32> to vector<16x256xbf16>
    %c0_12 = arith.constant 0 : index
    %c0_13 = arith.constant 0 : index
    %20 = vector.load %arg6[%c0_12, %c0_13] : memref<256x128xbf16, #tpu.memory_space<vmem>>, vector<256x128xbf16>
    %cst_14 = arith.constant dense<0.000000e+00> : vector<16x128xf32>
    %21 = tpu.matmul %19, %20, %cst_14 {dimension_numbers = #tpu.dot_dimension_numbers<[1], [0], [0], [1], [0, 0, 1, 1], [], []>} : vector<16x256xbf16>, vector<256x128xbf16>, vector<16x128xf32> -> vector<16x128xf32>
    %c0_15 = arith.constant 0 : index
    %c0_16 = arith.constant 0 : index
    %22 = vector.load %arg7[%c0_15, %c0_16] : memref<1x128xf32, #tpu.memory_space<vmem>>, vector<1x128xf32>
    %23 = vector.broadcast %22 : vector<1x128xf32> to vector<16x128xf32>
    %24 = arith.addf %21, %23 : vector<16x128xf32>
    %cst_17 = arith.constant 2.000000e-01 : f32
    %25 = vector.broadcast %cst_17 : f32 to vector<16x128xf32>
    %26 = arith.mulf %25, %24 : vector<16x128xf32>
    %27 = arith.maximumf %24, %26 : vector<16x128xf32>
    %c0_18 = arith.constant 0 : index
    %c0_19 = arith.constant 0 : index
    %28 = vector.load %arg8[%c0_18, %c0_19] : memref<1x128xbf16, #tpu.memory_space<vmem>>, vector<1x128xbf16>
    %29 = arith.truncf %27 : vector<16x128xf32> to vector<16x128xbf16>
    %cst_20 = arith.constant dense<0.000000e+00> : vector<1x16xf32>
    %30 = tpu.matmul %28, %29, %cst_20 {dimension_numbers = #tpu.dot_dimension_numbers<[1], [1], [0], [0], [0, 0, 1, 0], [], []>} : vector<1x128xbf16>, vector<16x128xbf16>, vector<1x16xf32> -> vector<1x16xf32>
    %c0_21 = arith.constant 0 : index
    %c0_22 = arith.constant 0 : index
    %31 = vector.load %arg9[%c0_21, %c0_22] : memref<1x1xf32, #tpu.memory_space<vmem>>, vector<1x1xf32>
    %32 = vector.broadcast %31 : vector<1x1xf32> to vector<1x16xf32>
    %33 = arith.addf %30, %32 : vector<1x16xf32>
    %34 = vector.shape_cast %33 : vector<1x16xf32> to vector<1x1x16xf32>
    %c0_23 = arith.constant 0 : index
    %c0_24 = arith.constant 0 : index
    %c0_25 = arith.constant 0 : index
    %35 = vector.load %arg10[%c0_23, %c0_24, %c0_25] : memref<1x1x16xf32, #tpu.memory_space<vmem>>, vector<1x1x16xf32>
    tpu.vector_store %arg10[%c0_23, %c0_24, %c0_25], %34 {strides = array<i32>} : memref<1x1x16xf32, #tpu.memory_space<vmem>>, vector<1x1x16xf32>,
    return
  }
  func.func @transform_0(%arg0: i32) -> (i32, i32) {
    %c0_i32 = arith.constant 0 : i32
    %c0_i32_0 = arith.constant 0 : i32
    return %arg0, %c0_i32 : i32, i32
  }
  func.func @transform_1(%arg0: i32) -> (i32, i32) {
    %c0_i32 = arith.constant 0 : i32
    %c0_i32_0 = arith.constant 0 : i32
    %c0_i32_1 = arith.constant 0 : i32
    return %c0_i32, %c0_i32_0 : i32, i32
  }
  func.func @transform_2(%arg0: i32) -> (i32, i32) {
    %c0_i32 = arith.constant 0 : i32
    %c0_i32_0 = arith.constant 0 : i32
    %c0_i32_1 = arith.constant 0 : i32
    return %c0_i32, %c0_i32_0 : i32, i32
  }
  func.func @transform_3(%arg0: i32) -> (i32, i32) {
    %c0_i32 = arith.constant 0 : i32
    %c0_i32_0 = arith.constant 0 : i32
    %c0_i32_1 = arith.constant 0 : i32
    return %c0_i32, %c0_i32_0 : i32, i32
  }
  func.func @transform_4(%arg0: i32) -> (i32, i32) {
    %c0_i32 = arith.constant 0 : i32
    %c0_i32_0 = arith.constant 0 : i32
    %c0_i32_1 = arith.constant 0 : i32
    return %c0_i32, %c0_i32_0 : i32, i32
  }
  func.func @transform_5(%arg0: i32) -> (i32, i32) {
    %c0_i32 = arith.constant 0 : i32
    %c0_i32_0 = arith.constant 0 : i32
    %c0_i32_1 = arith.constant 0 : i32
    return %c0_i32, %c0_i32_0 : i32, i32
  }
  func.func @transform_6(%arg0: i32) -> (i32, i32) {
    %c0_i32 = arith.constant 0 : i32
    %c0_i32_0 = arith.constant 0 : i32
    %c0_i32_1 = arith.constant 0 : i32
    return %c0_i32, %c0_i32_0 : i32, i32
  }
  func.func @transform_7(%arg0: i32) -> (i32, i32) {
    %c0_i32 = arith.constant 0 : i32
    %c0_i32_0 = arith.constant 0 : i32
    %c0_i32_1 = arith.constant 0 : i32
    return %c0_i32, %c0_i32_0 : i32, i32
  }
  func.func @transform_8(%arg0: i32) -> (i32, i32) {
    %c0_i32 = arith.constant 0 : i32
    %c0_i32_0 = arith.constant 0 : i32
    %c0_i32_1 = arith.constant 0 : i32
    return %c0_i32, %c0_i32_0 : i32, i32
  }
  func.func @transform_9(%arg0: i32) -> (i32, i32, i32) {
    %c0_i32 = arith.constant 0 : i32
    %c0_i32_0 = arith.constant 0 : i32
    %c0_i32_1 = arith.constant 0 : i32
    return %arg0, %c0_i32, %c0_i32_0 : i32, i32, i32
  }
}

</mosaic_0001>

<llo_original>
// kernel: tpu_custom_call.1
$region0: #{tpu_custom_call.1}
  #allocation0 [shape = 'u32[]', space=smem, size = 0x4, offset = 0x4, fixed_abs, tag = 'smem constant byte address 0x4 - core index']
  #allocation1 [shape = 'u32[144,128]{1,0:T(1,128)}', space=vmem, size = 0x12000, scoped, tag = 'internal scratch']
  #allocation2 [shape = 'f32[1,1]{1,0:T(1,128)S(1)}', space=vmem, size = 0x200, scoped, tag = 'scoped memory for tpu_custom_call.1']
  %s0 = inlined_call_operand.hbm [shape: f32[16,1024], index: 0, kind: input, shape index: {}]
  %s1 = inlined_call_operand.hbm [shape: bf16[1024,512], index: 1, kind: input, shape index: {}]
  %s2 = inlined_call_operand.vmem [shape: f32[1,512], index: 2, kind: input, shape index: {}]
  %s3 = inlined_call_operand.hbm [shape: bf16[512,256], index: 3, kind: input, shape index: {}]
  %s4 = inlined_call_operand.vmem [shape: f32[1,256], index: 4, kind: input, shape index: {}]
  %s5 = inlined_call_operand.hbm [shape: bf16[256,128], index: 5, kind: input, shape index: {}]
  %s6 = inlined_call_operand.vmem [shape: f32[1,128], index: 6, kind: input, shape index: {}]
  %s7 = inlined_call_operand.vmem [shape: bf16[1,128], index: 7, kind: input, shape index: {}]
  %s8 = inlined_call_operand.<no memory space> [shape: f32[1,1], index: 8, kind: input, shape index: {}]
  %s9 = inlined_call_operand.hbm [shape: f32[1,1,16], index: 9, kind: output, shape index: {}]
  %s10 = sld [smem:[#allocation0]]
  $region62: #{tpu_custom_call.1} parent=0
    _
  %s12 = ssub.s32 1, %s10
  %s13 = scalar_select 0, %s12, %s10
  %v14 = vstv %s8
  %15 = vst [vmem:[#allocation2] sm:$0x1] %v14
  $region1: #{tpu_custom_call.1} parent=0
    #allocation3 [shape = 'u8[65536]{0}', space=vmem, size = 0x10000, scoped, tag = 'input window, operand 0, single buffered']
    #allocation4 [shape = 's32[1]{0}', space=sflag, size = 0x4, scoped, tag = 'scoped memory for tpu_custom_call.1']
    #allocation5 [shape = 's32[1]{0}', space=sflag, size = 0x4, scoped, tag = 'scoped memory for tpu_custom_call.1']
    #allocation6 [shape = 'u8[1048576]{0}', space=vmem, size = 0x100000, scoped, tag = 'input window, operand 1, single buffered']
    #allocation7 [shape = 's32[1]{0}', space=sflag, size = 0x4, scoped, tag = 'scoped memory for tpu_custom_call.1']
    #allocation8 [shape = 'u8[262144]{0}', space=vmem, size = 0x40000, scoped, tag = 'input window, operand 3, single buffered']
    #allocation9 [shape = 'u8[65536]{0}', space=vmem, size = 0x10000, scoped, tag = 'input window, operand 5, single buffered']
    #allocation10 [shape = 's32[1]{0}', space=sflag, size = 0x4, scoped, tag = 'scoped memory for tpu_custom_call.1']
    #allocation11 [shape = 'u8[512]{0}', space=vmem, size = 0x400, scoped, tag = 'output window, operand 0, single buffered']
    %16 = vsyncpa [#allocation4], 0
    %17 = vsyncpa [#allocation7], 0
    %18 = vsyncpa [#allocation10], 0
    %19 = vsyncpa [#allocation5], 0
    // Predicated region
    $region2: #{tpu_custom_call.1} parent=1 // pred_check
      _
    $region3: #{tpu_custom_call.1} parent=1 // pred_check_branch
      %21 = sbr.rel (0) target = $region5
    $region4: #{tpu_custom_call.1} parent=1 // pred_region
      %s23 = ssub.s32 2048, 2048
      %24 = vsyncadd [#allocation4], %s23
      %s25 = sshll.u32 [#allocation3], 4
      %s26 = int_to_ptr.vmem [resolvable:$true] %s25
      %31 = dma.hbm_to_vmem [thread:$0]  %s0, 2048, %s26, [#allocation4], 1024, 1024, 64
    $region5: #{tpu_custom_call.1} parent=1 // pred_fallthru
      _
    // Predicated region
    $region6: #{tpu_custom_call.1} parent=1 // pred_check
      _
    $region7: #{tpu_custom_call.1} parent=1 // pred_check_branch
      %33 = sbr.rel (0) target = $region9
    $region8: #{tpu_custom_call.1} parent=1 // pred_region
      %s35 = ssub.s32 32768, 32768
      %36 = vsyncadd [#allocation7], %s35
      %s37 = sshll.u32 [#allocation6], 4
      %s38 = int_to_ptr.vmem [resolvable:$true] %s37
      %43 = dma.hbm_to_vmem [thread:$0]  %s1, 32768, %s38, [#allocation7], 256, 256, 16
    $region9: #{tpu_custom_call.1} parent=1 // pred_fallthru
      _
    // Predicated region
    $region10: #{tpu_custom_call.1} parent=1 // pred_check
      _
    $region11: #{tpu_custom_call.1} parent=1 // pred_check_branch
      %45 = sbr.rel (0) target = $region13
    $region12: #{tpu_custom_call.1} parent=1 // pred_region
      _
    $region13: #{tpu_custom_call.1} parent=1 // pred_fallthru
      _
    // Predicated region
    $region14: #{tpu_custom_call.1} parent=1 // pred_check
      _
    $region15: #{tpu_custom_call.1} parent=1 // pred_check_branch
      %47 = sbr.rel (0) target = $region17
    $region16: #{tpu_custom_call.1} parent=1 // pred_region
      %s49 = ssub.s32 8192, 8192
      %50 = vsyncadd [#allocation7], %s49
      %s51 = sshll.u32 [#allocation8], 4
      %s52 = int_to_ptr.vmem [resolvable:$true] %s51
      %57 = dma.hbm_to_vmem [thread:$0]  %s3, 8192, %s52, [#allocation7], 128, 128, 8
    $region17: #{tpu_custom_call.1} parent=1 // pred_fallthru
      _
    // Predicated region
    $region18: #{tpu_custom_call.1} parent=1 // pred_check
      _
    $region19: #{tpu_custom_call.1} parent=1 // pred_check_branch
      %59 = sbr.rel (0) target = $region21
    $region20: #{tpu_custom_call.1} parent=1 // pred_region
      _
    $region21: #{tpu_custom_call.1} parent=1 // pred_fallthru
      _
    // Predicated region
    $region22: #{tpu_custom_call.1} parent=1 // pred_check
      _
    $region23: #{tpu_custom_call.1} parent=1 // pred_check_branch
      %61 = sbr.rel (0) target = $region25
    $region24: #{tpu_custom_call.1} parent=1 // pred_region
      %s63 = ssub.s32 2048, 2048
      %64 = vsyncadd [#allocation10], %s63
      %s65 = sshll.u32 [#allocation9], 4
      %s66 = int_to_ptr.vmem [resolvable:$true] %s65
      %71 = dma.hbm_to_vmem [thread:$0]  %s5, 2048, %s66, [#allocation10], 64, 64, 4
    $region25: #{tpu_custom_call.1} parent=1 // pred_fallthru
      _
    // Predicated region
    $region26: #{tpu_custom_call.1} parent=1 // pred_check
      _
    $region27: #{tpu_custom_call.1} parent=1 // pred_check_branch
      %73 = sbr.rel (0) target = $region29
    $region28: #{tpu_custom_call.1} parent=1 // pred_region
      _
    $region29: #{tpu_custom_call.1} parent=1 // pred_fallthru
      _
    // Predicated region
    $region30: #{tpu_custom_call.1} parent=1 // pred_check
      _
    $region31: #{tpu_custom_call.1} parent=1 // pred_check_branch
      %75 = sbr.rel (0) target = $region33
    $region32: #{tpu_custom_call.1} parent=1 // pred_region
      _
    $region33: #{tpu_custom_call.1} parent=1 // pred_fallthru
      _
    // Predicated region
    $region34: #{tpu_custom_call.1} parent=1 // pred_check
      _
    $region35: #{tpu_custom_call.1} parent=1 // pred_check_branch
      %77 = sbr.rel (0) target = $region37
    $region36: #{tpu_custom_call.1} parent=1 // pred_region
      _
    $region37: #{tpu_custom_call.1} parent=1 // pred_fallthru
      _
    // Predicated region
    $region38: #{tpu_custom_call.1} parent=1 // pred_check
      _
    $region39: #{tpu_custom_call.1} parent=1 // pred_check_branch
      %79 = sbr.rel (0) target = $region41
    $region40: #{tpu_custom_call.1} parent=1 // pred_region
      %80 = dma.done [#allocation4], 2048
    $region41: #{tpu_custom_call.1} parent=1 // pred_fallthru
      _
    // Predicated region
    $region42: #{tpu_custom_call.1} parent=1 // pred_check
      _
    $region43: #{tpu_custom_call.1} parent=1 // pred_check_branch
      %82 = sbr.rel (0) target = $region45
    $region44: #{tpu_custom_call.1} parent=1 // pred_region
      %83 = dma.done [#allocation7], 32768
    $region45: #{tpu_custom_call.1} parent=1 // pred_fallthru
      _
    // Predicated region
    $region46: #{tpu_custom_call.1} parent=1 // pred_check
      _
    $region47: #{tpu_custom_call.1} parent=1 // pred_check_branch
      %85 = sbr.rel (0) target = $region49
    $region48: #{tpu_custom_call.1} parent=1 // pred_region
      %86 = dma.done [#allocation7], 8192
    $region49: #{tpu_custom_call.1} parent=1 // pred_fallthru
      _
    // Predicated region
    $region50: #{tpu_custom_call.1} parent=1 // pred_check
      _
    $region51: #{tpu_custom_call.1} parent=1 // pred_check_branch
      %88 = sbr.rel (0) target = $region53
    $region52: #{tpu_custom_call.1} parent=1 // pred_region
      %89 = dma.done [#allocation10], 2048
    $region53: #{tpu_custom_call.1} parent=1 // pred_fallthru
      _
    %v91 = vld [vmem:[#allocation3] sm:$0xff]
    %v92 = vld [vmem:[#allocation3 + $0x8] sm:$0xff]
    %v93 = vld [vmem:[#allocation3 + $0x10] sm:$0xff]
    %v94 = vld [vmem:[#allocation3 + $0x18] sm:$0xff]
    %v95 = vld [vmem:[#allocation3 + $0x20] sm:$0xff]
    %v96 = vld [vmem:[#allocation3 + $0x28] sm:$0xff]
    %v97 = vld [vmem:[#allocation3 + $0x30] sm:$0xff]
    %v98 = vld [vmem:[#allocation3 + $0x38] sm:$0xff]
    %v99 = vld [vmem:[#allocation3 + $0x40] sm:$0xff]
    %v100 = vld [vmem:[#allocation3 + $0x48] sm:$0xff]
    %v101 = vld [vmem:[#allocation3 + $0x50] sm:$0xff]
    %v102 = vld [vmem:[#allocation3 + $0x58] sm:$0xff]
    %v103 = vld [vmem:[#allocation3 + $0x60] sm:$0xff]
    %v104 = vld [vmem:[#allocation3 + $0x68] sm:$0xff]
    %v105 = vld [vmem:[#allocation3 + $0x70] sm:$0xff]
    %v106 = vld [vmem:[#allocation3 + $0x78] sm:$0xff]
    %v107 = vpack.c.bf16 %v99, %v91
    %v108 = vpack.c.bf16 %v100, %v92
    %v109 = vpack.c.bf16 %v101, %v93
    %v110 = vpack.c.bf16 %v102, %v94
    %v111 = vpack.c.bf16 %v103, %v95
    %v112 = vpack.c.bf16 %v104, %v96
    %v113 = vpack.c.bf16 %v105, %v97
    %v114 = vpack.c.bf16 %v106, %v98
    %v115 = vld [vmem:[#allocation6] sm:$0xff]
    %v116 = vld [vmem:[#allocation6 + $0x8] sm:$0xff]
    %v117 = vld [vmem:[#allocation6 + $0x10] sm:$0xff]
    %v118 = vld [vmem:[#allocation6 + $0x18] sm:$0xff]
    %v119 = vld [vmem:[#allocation6 + $0x20] sm:$0xff]
    %v120 = vld [vmem:[#allocation6 + $0x28] sm:$0xff]
    %v121 = vld [vmem:[#allocation6 + $0x30] sm:$0xff]
    %v122 = vld [vmem:[#allocation6 + $0x38] sm:$0xff]
    %v123 = vld [vmem:[#allocation6 + $0x40] sm:$0xff]
    %v124 = vld [vmem:[#allocation6 + $0x48] sm:$0xff]
    %v125 = vld [vmem:[#allocation6 + $0x50] sm:$0xff]
    %v126 = vld [vmem:[#allocation6 + $0x58] sm:$0xff]
    %v127 = vld [vmem:[#allocation6 + $0x60] sm:$0xff]
    %v128 = vld [vmem:[#allocation6 + $0x68] sm:$0xff]
    %v129 = vld [vmem:[#allocation6 + $0x70] sm:$0xff]
    %v130 = vld [vmem:[#allocation6 + $0x78] sm:$0xff]
    %v131 = vld [vmem:[#allocation6 + $0x80] sm:$0xff]
    %v132 = vld [vmem:[#allocation6 + $0x88] sm:$0xff]
    %v133 = vld [vmem:[#allocation6 + $0x90] sm:$0xff]
    %v134 = vld [vmem:[#allocation6 + $0x98] sm:$0xff]
    %v135 = vld [vmem:[#allocation6 + $0xa0] sm:$0xff]
    %v136 = vld [vmem:[#allocation6 + $0xa8] sm:$0xff]
    %v137 = vld [vmem:[#allocation6 + $0xb0] sm:$0xff]
    %v138 = vld [vmem:[#allocation6 + $0xb8] sm:$0xff]
    %v139 = vld [vmem:[#allocation6 + $0xc0] sm:$0xff]
    %v140 = vld [vmem:[#allocation6 + $0xc8] sm:$0xff]
    %v141 = vld [vmem:[#allocation6 + $0xd0] sm:$0xff]
    %v142 = vld [vmem:[#allocation6 + $0xd8] sm:$0xff]
    %v143 = vld [vmem:[#allocation6 + $0xe0] sm:$0xff]
    %v144 = vld [vmem:[#allocation6 + $0xe8] sm:$0xff]
    %v145 = vld [vmem:[#allocation6 + $0xf0] sm:$0xff]
    %v146 = vld [vmem:[#allocation6 + $0xf8] sm:$0xff]
    %v147 = vld [vmem:[#allocation6 + $0x100] sm:$0xff]
    %v148 = vld [vmem:[#allocation6 + $0x108] sm:$0xff]
    %v149 = vld [vmem:[#allocation6 + $0x110] sm:$0xff]
    %v150 = vld [vmem:[#allocation6 + $0x118] sm:$0xff]
    %v151 = vld [vmem:[#allocation6 + $0x120] sm:$0xff]
    %v152 = vld [vmem:[#allocation6 + $0x128] sm:$0xff]
    %v153 = vld [vmem:[#allocation6 + $0x130] sm:$0xff]
    %v154 = vld [vmem:[#allocation6 + $0x138] sm:$0xff]
    %v155 = vld [vmem:[#allocation6 + $0x140] sm:$0xff]
    %v156 = vld [vmem:[#allocation6 + $0x148] sm:$0xff]
    %v157 = vld [vmem:[#allocation6 + $0x150] sm:$0xff]
    %v158 = vld [vmem:[#allocation6 + $0x158] sm:$0xff]
    %v159 = vld [vmem:[#allocation6 + $0x160] sm:$0xff]
    %v160 = vld [vmem:[#allocation6 + $0x168] sm:$0xff]
    %v161 = vld [vmem:[#allocation6 + $0x170] sm:$0xff]
    %v162 = vld [vmem:[#allocation6 + $0x178] sm:$0xff]
    %v163 = vld [vmem:[#allocation6 + $0x180] sm:$0xff]
    %v164 = vld [vmem:[#allocation6 + $0x188] sm:$0xff]
    %v165 = vld [vmem:[#allocation6 + $0x190] sm:$0xff]
    %v166 = vld [vmem:[#allocation6 + $0x198] sm:$0xff]
    %v167 = vld [vmem:[#allocation6 + $0x1a0] sm:$0xff]
    %v168 = vld [vmem:[#allocation6 + $0x1a8] sm:$0xff]
    %v169 = vld [vmem:[#allocation6 + $0x1b0] sm:$0xff]
    %v170 = vld [vmem:[#allocation6 + $0x1b8] sm:$0xff]
    %v171 = vld [vmem:[#allocation6 + $0x1c0] sm:$0xff]
    %v172 = vld [vmem:[#allocation6 + $0x1c8] sm:$0xff]
    %v173 = vld [vmem:[#allocation6 + $0x1d0] sm:$0xff]
    %v174 = vld [vmem:[#allocation6 + $0x1d8] sm:$0xff]
    %v175 = vld [vmem:[#allocation6 + $0x1e0] sm:$0xff]
    %v176 = vld [vmem:[#allocation6 + $0x1e8] sm:$0xff]
    %v177 = vld [vmem:[#allocation6 + $0x1f0] sm:$0xff]
    %v178 = vld [vmem:[#allocation6 + $0x1f8] sm:$0xff]
    %v179 = vld [vmem:[#allocation6 + $0x200] sm:$0xff]
    %v180 = vld [vmem:[#allocation6 + $0x208] sm:$0xff]
    %v181 = vld [vmem:[#allocation6 + $0x210] sm:$0xff]
    %v182 = vld [vmem:[#allocation6 + $0x218] sm:$0xff]
    %v183 = vld [vmem:[#allocation6 + $0x220] sm:$0xff]
    %v184 = vld [vmem:[#allocation6 + $0x228] sm:$0xff]
    %v185 = vld [vmem:[#allocation6 + $0x230] sm:$0xff]
    %v186 = vld [vmem:[#allocation6 + $0x238] sm:$0xff]
    %v187 = vld [vmem:[#allocation6 + $0x240] sm:$0xff]
    %v188 = vld [vmem:[#allocation6 + $0x248] sm:$0xff]
    %v189 = vld [vmem:[#allocation6 + $0x250] sm:$0xff]
    %v190 = vld [vmem:[#allocation6 + $0x258] sm:$0xff]
    %v191 = vld [vmem:[#allocation6 + $0x260] sm:$0xff]
    %v192 = vld [vmem:[#allocation6 + $0x268] sm:$0xff]
    %v193 = vld [vmem:[#allocation6 + $0x270] sm:$0xff]
    %v194 = vld [vmem:[#allocation6 + $0x278] sm:$0xff]
    %v195 = vld [vmem:[#allocation6 + $0x280] sm:$0xff]
    %v196 = vld [vmem:[#allocation6 + $0x288] sm:$0xff]
    %v197 = vld [vmem:[#allocation6 + $0x290] sm:$0xff]
    %v198 = vld [vmem:[#allocation6 + $0x298] sm:$0xff]
    %v199 = vld [vmem:[#allocation6 + $0x2a0] sm:$0xff]
    %v200 = vld [vmem:[#allocation6 + $0x2a8] sm:$0xff]
    %v201 = vld [vmem:[#allocation6 + $0x2b0] sm:$0xff]
    %v202 = vld [vmem:[#allocation6 + $0x2b8] sm:$0xff]
    %v203 = vld [vmem:[#allocation6 + $0x2c0] sm:$0xff]
    %v204 = vld [vmem:[#allocation6 + $0x2c8] sm:$0xff]
    %v205 = vld [vmem:[#allocation6 + $0x2d0] sm:$0xff]
    %v206 = vld [vmem:[#allocation6 + $0x2d8] sm:$0xff]
    %v207 = vld [vmem:[#allocation6 + $0x2e0] sm:$0xff]
    %v208 = vld [vmem:[#allocation6 + $0x2e8] sm:$0xff]
    %v209 = vld [vmem:[#allocation6 + $0x2f0] sm:$0xff]
    %v210 = vld [vmem:[#allocation6 + $0x2f8] sm:$0xff]
    %v211 = vld [vmem:[#allocation6 + $0x300] sm:$0xff]
    %v212 = vld [vmem:[#allocation6 + $0x308] sm:$0xff]
    %v213 = vld [vmem:[#allocation6 + $0x310] sm:$0xff]
    %v214 = vld [vmem:[#allocation6 + $0x318] sm:$0xff]
    %v215 = vld [vmem:[#allocation6 + $0x320] sm:$0xff]
    %v216 = vld [vmem:[#allocation6 + $0x328] sm:$0xff]
    %v217 = vld [vmem:[#allocation6 + $0x330] sm:$0xff]
    %v218 = vld [vmem:[#allocation6 + $0x338] sm:$0xff]
    %v219 = vld [vmem:[#allocation6 + $0x340] sm:$0xff]
    %v220 = vld [vmem:[#allocation6 + $0x348] sm:$0xff]
    %v221 = vld [vmem:[#allocation6 + $0x350] sm:$0xff]
    %v222 = vld [vmem:[#allocation6 + $0x358] sm:$0xff]
    %v223 = vld [vmem:[#allocation6 + $0x360] sm:$0xff]
    %v224 = vld [vmem:[#allocation6 + $0x368] sm:$0xff]
    %v225 = vld [vmem:[#allocation6 + $0x370] sm:$0xff]
    %v226 = vld [vmem:[#allocation6 + $0x378] sm:$0xff]
    %v227 = vld [vmem:[#allocation6 + $0x380] sm:$0xff]
    %v228 = vld [vmem:[#allocation6 + $0x388] sm:$0xff]
    %v229 = vld [vmem:[#allocation6 + $0x390] sm:$0xff]
    %v230 = vld [vmem:[#allocation6 + $0x398] sm:$0xff]
    %v231 = vld [vmem:[#allocation6 + $0x3a0] sm:$0xff]
    %v232 = vld [vmem:[#allocation6 + $0x3a8] sm:$0xff]
    %v233 = vld [vmem:[#allocation6 + $0x3b0] sm:$0xff]
    %v234 = vld [vmem:[#allocation6 + $0x3b8] sm:$0xff]
    %v235 = vld [vmem:[#allocation6 + $0x3c0] sm:$0xff]
    %v236 = vld [vmem:[#allocation6 + $0x3c8] sm:$0xff]
    %v237 = vld [vmem:[#allocation6 + $0x3d0] sm:$0xff]
    %v238 = vld [vmem:[#allocation6 + $0x3d8] sm:$0xff]
    %v239 = vld [vmem:[#allocation6 + $0x3e0] sm:$0xff]
    %v240 = vld [vmem:[#allocation6 + $0x3e8] sm:$0xff]
    %v241 = vld [vmem:[#allocation6 + $0x3f0] sm:$0xff]
    %v242 = vld [vmem:[#allocation6 + $0x3f8] sm:$0xff]
    %v243 = vld [vmem:[#allocation6 + $0x400] sm:$0xff]
    %v244 = vld [vmem:[#allocation6 + $0x408] sm:$0xff]
    %v245 = vld [vmem:[#allocation6 + $0x410] sm:$0xff]
    %v246 = vld [vmem:[#allocation6 + $0x418] sm:$0xff]
    %v247 = vld [vmem:[#allocation6 + $0x420] sm:$0xff]
    %v248 = vld [vmem:[#allocation6 + $0x428] sm:$0xff]
    %v249 = vld [vmem:[#allocation6 + $0x430] sm:$0xff]
    %v250 = vld [vmem:[#allocation6 + $0x438] sm:$0xff]
    %v251 = vld [vmem:[#allocation6 + $0x440] sm:$0xff]
    %v252 = vld [vmem:[#allocation6 + $0x448] sm:$0xff]
    %v253 = vld [vmem:[#allocation6 + $0x450] sm:$0xff]
    %v254 = vld [vmem:[#allocation6 + $0x458] sm:$0xff]
    %v255 = vld [vmem:[#allocation6 + $0x460] sm:$0xff]
    %v256 = vld [vmem:[#allocation6 + $0x468] sm:$0xff]
    %v257 = vld [vmem:[#allocation6 + $0x470] sm:$0xff]
    %v258 = vld [vmem:[#allocation6 + $0x478] sm:$0xff]
    %v259 = vld [vmem:[#allocation6 + $0x480] sm:$0xff]
    %v260 = vld [vmem:[#allocation6 + $0x488] sm:$0xff]
    %v261 = vld [vmem:[#allocation6 + $0x490] sm:$0xff]
    %v262 = vld [vmem:[#allocation6 + $0x498] sm:$0xff]
    %v263 = vld [vmem:[#allocation6 + $0x4a0] sm:$0xff]
    %v264 = vld [vmem:[#allocation6 + $0x4a8] sm:$0xff]
    %v265 = vld [vmem:[#allocation6 + $0x4b0] sm:$0xff]
    %v266 = vld [vmem:[#allocation6 + $0x4b8] sm:$0xff]
    %v267 = vld [vmem:[#allocation6 + $0x4c0] sm:$0xff]
    %v268 = vld [vmem:[#allocation6 + $0x4c8] sm:$0xff]
    %v269 = vld [vmem:[#allocation6 + $0x4d0] sm:$0xff]
    %v270 = vld [vmem:[#allocation6 + $0x4d8] sm:$0xff]
    %v271 = vld [vmem:[#allocation6 + $0x4e0] sm:$0xff]
    %v272 = vld [vmem:[#allocation6 + $0x4e8] sm:$0xff]
    %v273 = vld [vmem:[#allocation6 + $0x4f0] sm:$0xff]
    %v274 = vld [vmem:[#allocation6 + $0x4f8] sm:$0xff]
    %v275 = vld [vmem:[#allocation6 + $0x500] sm:$0xff]
    %v276 = vld [vmem:[#allocation6 + $0x508] sm:$0xff]
    %v277 = vld [vmem:[#allocation6 + $0x510] sm:$0xff]
    %v278 = vld [vmem:[#allocation6 + $0x518] sm:$0xff]
    %v279 = vld [vmem:[#allocation6 + $0x520] sm:$0xff]
    %v280 = vld [vmem:[#allocation6 + $0x528] sm:$0xff]
    %v281 = vld [vmem:[#allocation6 + $0x530] sm:$0xff]
    %v282 = vld [vmem:[#allocation6 + $0x538] sm:$0xff]
    %v283 = vld [vmem:[#allocation6 + $0x540] sm:$0xff]
    %v284 = vld [vmem:[#allocation6 + $0x548] sm:$0xff]
    %v285 = vld [vmem:[#allocation6 + $0x550] sm:$0xff]
    %v286 = vld [vmem:[#allocation6 + $0x558] sm:$0xff]
    %v287 = vld [vmem:[#allocation6 + $0x560] sm:$0xff]
    %v288 = vld [vmem:[#allocation6 + $0x568] sm:$0xff]
    %v289 = vld [vmem:[#allocation6 + $0x570] sm:$0xff]
    %v290 = vld [vmem:[#allocation6 + $0x578] sm:$0xff]
    %v291 = vld [vmem:[#allocation6 + $0x580] sm:$0xff]
    %v292 = vld [vmem:[#allocation6 + $0x588] sm:$0xff]
    %v293 = vld [vmem:[#allocation6 + $0x590] sm:$0xff]
    %v294 = vld [vmem:[#allocation6 + $0x598] sm:$0xff]
    %v295 = vld [vmem:[#allocation6 + $0x5a0] sm:$0xff]
    %v296 = vld [vmem:[#allocation6 + $0x5a8] sm:$0xff]
    %v297 = vld [vmem:[#allocation6 + $0x5b0] sm:$0xff]
    %v298 = vld [vmem:[#allocation6 + $0x5b8] sm:$0xff]
    %v299 = vld [vmem:[#allocation6 + $0x5c0] sm:$0xff]
    %v300 = vld [vmem:[#allocation6 + $0x5c8] sm:$0xff]
    %v301 = vld [vmem:[#allocation6 + $0x5d0] sm:$0xff]
    %v302 = vld [vmem:[#allocation6 + $0x5d8] sm:$0xff]
    %v303 = vld [vmem:[#allocation6 + $0x5e0] sm:$0xff]
    %v304 = vld [vmem:[#allocation6 + $0x5e8] sm:$0xff]
    %v305 = vld [vmem:[#allocation6 + $0x5f0] sm:$0xff]
    %v306 = vld [vmem:[#allocation6 + $0x5f8] sm:$0xff]
    %v307 = vld [vmem:[#allocation6 + $0x600] sm:$0xff]
    %v308 = vld [vmem:[#allocation6 + $0x608] sm:$0xff]
    %v309 = vld [vmem:[#allocation6 + $0x610] sm:$0xff]
    %v310 = vld [vmem:[#allocation6 + $0x618] sm:$0xff]
    %v311 = vld [vmem:[#allocation6 + $0x620] sm:$0xff]
    %v312 = vld [vmem:[#allocation6 + $0x628] sm:$0xff]
    %v313 = vld [vmem:[#allocation6 + $0x630] sm:$0xff]
    %v314 = vld [vmem:[#allocation6 + $0x638] sm:$0xff]
    %v315 = vld [vmem:[#allocation6 + $0x640] sm:$0xff]
    %v316 = vld [vmem:[#allocation6 + $0x648] sm:$0xff]
    %v317 = vld [vmem:[#allocation6 + $0x650] sm:$0xff]
    %v318 = vld [vmem:[#allocation6 + $0x658] sm:$0xff]
    %v319 = vld [vmem:[#allocation6 + $0x660] sm:$0xff]
    %v320 = vld [vmem:[#allocation6 + $0x668] sm:$0xff]
    %v321 = vld [vmem:[#allocation6 + $0x670] sm:$0xff]
    %v322 = vld [vmem:[#allocation6 + $0x678] sm:$0xff]
    %v323 = vld [vmem:[#allocation6 + $0x680] sm:$0xff]
    %v324 = vld [vmem:[#allocation6 + $0x688] sm:$0xff]
    %v325 = vld [vmem:[#allocation6 + $0x690] sm:$0xff]
    %v326 = vld [vmem:[#allocation6 + $0x698] sm:$0xff]
    %v327 = vld [vmem:[#allocation6 + $0x6a0] sm:$0xff]
    %v328 = vld [vmem:[#allocation6 + $0x6a8] sm:$0xff]
    %v329 = vld [vmem:[#allocation6 + $0x6b0] sm:$0xff]
    %v330 = vld [vmem:[#allocation6 + $0x6b8] sm:$0xff]
    %v331 = vld [vmem:[#allocation6 + $0x6c0] sm:$0xff]
    %v332 = vld [vmem:[#allocation6 + $0x6c8] sm:$0xff]
    %v333 = vld [vmem:[#allocation6 + $0x6d0] sm:$0xff]
    %v334 = vld [vmem:[#allocation6 + $0x6d8] sm:$0xff]
    %v335 = vld [vmem:[#allocation6 + $0x6e0] sm:$0xff]
    %v336 = vld [vmem:[#allocation6 + $0x6e8] sm:$0xff]
    %v337 = vld [vmem:[#allocation6 + $0x6f0] sm:$0xff]
    %v338 = vld [vmem:[#allocation6 + $0x6f8] sm:$0xff]
    %v339 = vld [vmem:[#allocation6 + $0x700] sm:$0xff]
    %v340 = vld [vmem:[#allocation6 + $0x708] sm:$0xff]
    %v341 = vld [vmem:[#allocation6 + $0x710] sm:$0xff]
    %v342 = vld [vmem:[#allocation6 + $0x718] sm:$0xff]
    %v343 = vld [vmem:[#allocation6 + $0x720] sm:$0xff]
    %v344 = vld [vmem:[#allocation6 + $0x728] sm:$0xff]
    %v345 = vld [vmem:[#allocation6 + $0x730] sm:$0xff]
    %v346 = vld [vmem:[#allocation6 + $0x738] sm:$0xff]
    %v347 = vld [vmem:[#allocation6 + $0x740] sm:$0xff]
    %v348 = vld [vmem:[#allocation6 + $0x748] sm:$0xff]
    %v349 = vld [vmem:[#allocation6 + $0x750] sm:$0xff]
    %v350 = vld [vmem:[#allocation6 + $0x758] sm:$0xff]
    %v351 = vld [vmem:[#allocation6 + $0x760] sm:$0xff]
    %v352 = vld [vmem:[#allocation6 + $0x768] sm:$0xff]
    %v353 = vld [vmem:[#allocation6 + $0x770] sm:$0xff]
    %v354 = vld [vmem:[#allocation6 + $0x778] sm:$0xff]
    %v355 = vld [vmem:[#allocation6 + $0x780] sm:$0xff]
    %v356 = vld [vmem:[#allocation6 + $0x788] sm:$0xff]
    %v357 = vld [vmem:[#allocation6 + $0x790] sm:$0xff]
    %v358 = vld [vmem:[#allocation6 + $0x798] sm:$0xff]
    %v359 = vld [vmem:[#allocation6 + $0x7a0] sm:$0xff]
    %v360 = vld [vmem:[#allocation6 + $0x7a8] sm:$0xff]
    %v361 = vld [vmem:[#allocation6 + $0x7b0] sm:$0xff]
    %v362 = vld [vmem:[#allocation6 + $0x7b8] sm:$0xff]
    %v363 = vld [vmem:[#allocation6 + $0x7c0] sm:$0xff]
    %v364 = vld [vmem:[#allocation6 + $0x7c8] sm:$0xff]
    %v365 = vld [vmem:[#allocation6 + $0x7d0] sm:$0xff]
    %v366 = vld [vmem:[#allocation6 + $0x7d8] sm:$0xff]
    %v367 = vld [vmem:[#allocation6 + $0x7e0] sm:$0xff]
    %v368 = vld [vmem:[#allocation6 + $0x7e8] sm:$0xff]
    %v369 = vld [vmem:[#allocation6 + $0x7f0] sm:$0xff]
    %v370 = vld [vmem:[#allocation6 + $0x7f8] sm:$0xff]
    %v371 = vld [vmem:[%s2] sm:$0xf]
    %v373 = vlaneseq
    %v374 = vshrl.u32 %v373, 7
    %v375 = vsub.s32 0, %v374
    %v376 = vrot.slane %v371, %v375
    %v377 = vlaneseq
    %v378 = vshrl.u32 %v377, 7
    %v379 = vsub.s32 1, %v378
    %v380 = vrot.slane %v371, %v379
    %v381 = vlaneseq
    %v382 = vshrl.u32 %v381, 7
    %v383 = vsub.s32 2, %v382
    %v384 = vrot.slane %v371, %v383
    %v385 = vlaneseq
    %v386 = vshrl.u32 %v385, 7
    %v387 = vsub.s32 3, %v386
    %v388 = vrot.slane %v371, %v387
    %v649 = vunpack.c.l.b16 %v115
    %v650 = vunpack.c.h.b16 %v115
    %v651 = vunpack.c.l.b16 %v116
    %v652 = vunpack.c.h.b16 %v116
    %v653 = vunpack.c.l.b16 %v117
    %v654 = vunpack.c.h.b16 %v117
    %v655 = vunpack.c.l.b16 %v118
    %v656 = vunpack.c.h.b16 %v118
    %v657 = vunpack.c.l.b16 %v119
    %v658 = vunpack.c.h.b16 %v119
    %v659 = vunpack.c.l.b16 %v120
    %v660 = vunpack.c.h.b16 %v120
    %v661 = vunpack.c.l.b16 %v121
    %v662 = vunpack.c.h.b16 %v121
    %v663 = vunpack.c.l.b16 %v122
    %v664 = vunpack.c.h.b16 %v122
    %v665 = vunpack.c.l.b16 %v123
    %v666 = vunpack.c.h.b16 %v123
    %v667 = vunpack.c.l.b16 %v124
    %v668 = vunpack.c.h.b16 %v124
    %v669 = vunpack.c.l.b16 %v125
    %v670 = vunpack.c.h.b16 %v125
    %v671 = vunpack.c.l.b16 %v126
    %v672 = vunpack.c.h.b16 %v126
    %v673 = vunpack.c.l.b16 %v127
    %v674 = vunpack.c.h.b16 %v127
    %v675 = vunpack.c.l.b16 %v128
    %v676 = vunpack.c.h.b16 %v128
    %v677 = vunpack.c.l.b16 %v129
    %v678 = vunpack.c.h.b16 %v129
    %v679 = vunpack.c.l.b16 %v130
    %v680 = vunpack.c.h.b16 %v130
    %v681 = vunpack.c.l.b16 %v131
    %v682 = vunpack.c.h.b16 %v131
    %v683 = vunpack.c.l.b16 %v132
    %v684 = vunpack.c.h.b16 %v132
    %v685 = vunpack.c.l.b16 %v133
    %v686 = vunpack.c.h.b16 %v133
    %v687 = vunpack.c.l.b16 %v134
    %v688 = vunpack.c.h.b16 %v134
    %v689 = vunpack.c.l.b16 %v135
    %v690 = vunpack.c.h.b16 %v135
    %v691 = vunpack.c.l.b16 %v136
    %v692 = vunpack.c.h.b16 %v136
    %v693 = vunpack.c.l.b16 %v137
    %v694 = vunpack.c.h.b16 %v137
    %v695 = vunpack.c.l.b16 %v138
    %v696 = vunpack.c.h.b16 %v138
    %v697 = vunpack.c.l.b16 %v139
    %v698 = vunpack.c.h.b16 %v139
    %v699 = vunpack.c.l.b16 %v140
    %v700 = vunpack.c.h.b16 %v140
    %v701 = vunpack.c.l.b16 %v141
    %v702 = vunpack.c.h.b16 %v141
    %v703 = vunpack.c.l.b16 %v142
    %v704 = vunpack.c.h.b16 %v142
    %v705 = vunpack.c.l.b16 %v143
    %v706 = vunpack.c.h.b16 %v143
    %v707 = vunpack.c.l.b16 %v144
    %v708 = vunpack.c.h.b16 %v144
    %v709 = vunpack.c.l.b16 %v145
    %v710 = vunpack.c.h.b16 %v145
    %v711 = vunpack.c.l.b16 %v146
    %v712 = vunpack.c.h.b16 %v146
    %v713 = vunpack.c.l.b16 %v147
    %v714 = vunpack.c.h.b16 %v147
    %v715 = vunpack.c.l.b16 %v148
    %v716 = vunpack.c.h.b16 %v148
    %v717 = vunpack.c.l.b16 %v149
    %v718 = vunpack.c.h.b16 %v149
    %v719 = vunpack.c.l.b16 %v150
    %v720 = vunpack.c.h.b16 %v150
    %v721 = vunpack.c.l.b16 %v151
    %v722 = vunpack.c.h.b16 %v151
    %v723 = vunpack.c.l.b16 %v152
    %v724 = vunpack.c.h.b16 %v152
    %v725 = vunpack.c.l.b16 %v153
    %v726 = vunpack.c.h.b16 %v153
    %v727 = vunpack.c.l.b16 %v154
    %v728 = vunpack.c.h.b16 %v154
    %v729 = vunpack.c.l.b16 %v155
    %v730 = vunpack.c.h.b16 %v155
    %v731 = vunpack.c.l.b16 %v156
    %v732 = vunpack.c.h.b16 %v156
    %v733 = vunpack.c.l.b16 %v157
    %v734 = vunpack.c.h.b16 %v157
    %v735 = vunpack.c.l.b16 %v158
    %v736 = vunpack.c.h.b16 %v158
    %v737 = vunpack.c.l.b16 %v159
    %v738 = vunpack.c.h.b16 %v159
    %v739 = vunpack.c.l.b16 %v160
    %v740 = vunpack.c.h.b16 %v160
    %v741 = vunpack.c.l.b16 %v161
    %v742 = vunpack.c.h.b16 %v161
    %v743 = vunpack.c.l.b16 %v162
    %v744 = vunpack.c.h.b16 %v162
    %v745 = vunpack.c.l.b16 %v163
    %v746 = vunpack.c.h.b16 %v163
    %v747 = vunpack.c.l.b16 %v164
    %v748 = vunpack.c.h.b16 %v164
    %v749 = vunpack.c.l.b16 %v165
    %v750 = vunpack.c.h.b16 %v165
    %v751 = vunpack.c.l.b16 %v166
    %v752 = vunpack.c.h.b16 %v166
    %v753 = vunpack.c.l.b16 %v167
    %v754 = vunpack.c.h.b16 %v167
    %v755 = vunpack.c.l.b16 %v168
    %v756 = vunpack.c.h.b16 %v168
    %v757 = vunpack.c.l.b16 %v169
    %v758 = vunpack.c.h.b16 %v169
    %v759 = vunpack.c.l.b16 %v170
    %v760 = vunpack.c.h.b16 %v170
    %v761 = vunpack.c.l.b16 %v171
    %v762 = vunpack.c.h.b16 %v171
    %v763 = vunpack.c.l.b16 %v172
    %v764 = vunpack.c.h.b16 %v172
    %v765 = vunpack.c.l.b16 %v173
    %v766 = vunpack.c.h.b16 %v173
    %v767 = vunpack.c.l.b16 %v174
    %v768 = vunpack.c.h.b16 %v174
    %v769 = vunpack.c.l.b16 %v175
    %v770 = vunpack.c.h.b16 %v175
    %v771 = vunpack.c.l.b16 %v176
    %v772 = vunpack.c.h.b16 %v176
    %v773 = vunpack.c.l.b16 %v177
    %v774 = vunpack.c.h.b16 %v177
    %v775 = vunpack.c.l.b16 %v178
    %v776 = vunpack.c.h.b16 %v178
    %v777 = vunpack.c.l.b16 %v179
    %v778 = vunpack.c.h.b16 %v179
    %v779 = vunpack.c.l.b16 %v180
    %v780 = vunpack.c.h.b16 %v180
    %v781 = vunpack.c.l.b16 %v181
    %v782 = vunpack.c.h.b16 %v181
    %v783 = vunpack.c.l.b16 %v182
    %v784 = vunpack.c.h.b16 %v182
    %v785 = vunpack.c.l.b16 %v183
    %v786 = vunpack.c.h.b16 %v183
    %v787 = vunpack.c.l.b16 %v184
    %v788 = vunpack.c.h.b16 %v184
    %v789 = vunpack.c.l.b16 %v185
    %v790 = vunpack.c.h.b16 %v185
    %v791 = vunpack.c.l.b16 %v186
    %v792 = vunpack.c.h.b16 %v186
    %v793 = vunpack.c.l.b16 %v187
    %v794 = vunpack.c.h.b16 %v187
    %v795 = vunpack.c.l.b16 %v188
    %v796 = vunpack.c.h.b16 %v188
    %v797 = vunpack.c.l.b16 %v189
    %v798 = vunpack.c.h.b16 %v189
    %v799 = vunpack.c.l.b16 %v190
    %v800 = vunpack.c.h.b16 %v190
    %v801 = vunpack.c.l.b16 %v191
    %v802 = vunpack.c.h.b16 %v191
    %v803 = vunpack.c.l.b16 %v192
    %v804 = vunpack.c.h.b16 %v192
    %v805 = vunpack.c.l.b16 %v193
    %v806 = vunpack.c.h.b16 %v193
    %v807 = vunpack.c.l.b16 %v194
    %v808 = vunpack.c.h.b16 %v194
    %v809 = vunpack.c.l.b16 %v195
    %v810 = vunpack.c.h.b16 %v195
    %v811 = vunpack.c.l.b16 %v196
    %v812 = vunpack.c.h.b16 %v196
    %v813 = vunpack.c.l.b16 %v197
    %v814 = vunpack.c.h.b16 %v197
    %v815 = vunpack.c.l.b16 %v198
    %v816 = vunpack.c.h.b16 %v198
    %v817 = vunpack.c.l.b16 %v199
    %v818 = vunpack.c.h.b16 %v199
    %v819 = vunpack.c.l.b16 %v200
    %v820 = vunpack.c.h.b16 %v200
    %v821 = vunpack.c.l.b16 %v201
    %v822 = vunpack.c.h.b16 %v201
    %v823 = vunpack.c.l.b16 %v202
    %v824 = vunpack.c.h.b16 %v202
    %v825 = vunpack.c.l.b16 %v203
    %v826 = vunpack.c.h.b16 %v203
    %v827 = vunpack.c.l.b16 %v204
    %v828 = vunpack.c.h.b16 %v204
    %v829 = vunpack.c.l.b16 %v205
    %v830 = vunpack.c.h.b16 %v205
    %v831 = vunpack.c.l.b16 %v206
    %v832 = vunpack.c.h.b16 %v206
    %v833 = vunpack.c.l.b16 %v207
    %v834 = vunpack.c.h.b16 %v207
    %v835 = vunpack.c.l.b16 %v208
    %v836 = vunpack.c.h.b16 %v208
    %v837 = vunpack.c.l.b16 %v209
    %v838 = vunpack.c.h.b16 %v209
    %v839 = vunpack.c.l.b16 %v210
    %v840 = vunpack.c.h.b16 %v210
    %v841 = vunpack.c.l.b16 %v211
    %v842 = vunpack.c.h.b16 %v211
    %v843 = vunpack.c.l.b16 %v212
    %v844 = vunpack.c.h.b16 %v212
    %v845 = vunpack.c.l.b16 %v213
    %v846 = vunpack.c.h.b16 %v213
    %v847 = vunpack.c.l.b16 %v214
    %v848 = vunpack.c.h.b16 %v214
    %v849 = vunpack.c.l.b16 %v215
    %v850 = vunpack.c.h.b16 %v215
    %v851 = vunpack.c.l.b16 %v216
    %v852 = vunpack.c.h.b16 %v216
    %v853 = vunpack.c.l.b16 %v217
    %v854 = vunpack.c.h.b16 %v217
    %v855 = vunpack.c.l.b16 %v218
    %v856 = vunpack.c.h.b16 %v218
    %v857 = vunpack.c.l.b16 %v219
    %v858 = vunpack.c.h.b16 %v219
    %v859 = vunpack.c.l.b16 %v220
    %v860 = vunpack.c.h.b16 %v220
    %v861 = vunpack.c.l.b16 %v221
    %v862 = vunpack.c.h.b16 %v221
    %v863 = vunpack.c.l.b16 %v222
    %v864 = vunpack.c.h.b16 %v222
    %v865 = vunpack.c.l.b16 %v223
    %v866 = vunpack.c.h.b16 %v223
    %v867 = vunpack.c.l.b16 %v224
    %v868 = vunpack.c.h.b16 %v224
    %v869 = vunpack.c.l.b16 %v225
    %v870 = vunpack.c.h.b16 %v225
    %v871 = vunpack.c.l.b16 %v226
    %v872 = vunpack.c.h.b16 %v226
    %v873 = vunpack.c.l.b16 %v227
    %v874 = vunpack.c.h.b16 %v227
    %v875 = vunpack.c.l.b16 %v228
    %v876 = vunpack.c.h.b16 %v228
    %v877 = vunpack.c.l.b16 %v229
    %v878 = vunpack.c.h.b16 %v229
    %v879 = vunpack.c.l.b16 %v230
    %v880 = vunpack.c.h.b16 %v230
    %v881 = vunpack.c.l.b16 %v231
    %v882 = vunpack.c.h.b16 %v231
    %v883 = vunpack.c.l.b16 %v232
    %v884 = vunpack.c.h.b16 %v232
    %v885 = vunpack.c.l.b16 %v233
    %v886 = vunpack.c.h.b16 %v233
    %v887 = vunpack.c.l.b16 %v234
    %v888 = vunpack.c.h.b16 %v234
    %v889 = vunpack.c.l.b16 %v235
    %v890 = vunpack.c.h.b16 %v235
    %v891 = vunpack.c.l.b16 %v236
    %v892 = vunpack.c.h.b16 %v236
    %v893 = vunpack.c.l.b16 %v237
    %v894 = vunpack.c.h.b16 %v237
    %v895 = vunpack.c.l.b16 %v238
    %v896 = vunpack.c.h.b16 %v238
    %v897 = vunpack.c.l.b16 %v239
    %v898 = vunpack.c.h.b16 %v239
    %v899 = vunpack.c.l.b16 %v240
    %v900 = vunpack.c.h.b16 %v240
    %v901 = vunpack.c.l.b16 %v241
    %v902 = vunpack.c.h.b16 %v241
    %v903 = vunpack.c.l.b16 %v242
    %v904 = vunpack.c.h.b16 %v242
    %v905 = vunpack.c.l.b16 %v243
    %v906 = vunpack.c.h.b16 %v243
    %v907 = vunpack.c.l.b16 %v244
    %v908 = vunpack.c.h.b16 %v244
    %v909 = vunpack.c.l.b16 %v245
    %v910 = vunpack.c.h.b16 %v245
    %v911 = vunpack.c.l.b16 %v246
    %v912 = vunpack.c.h.b16 %v246
    %v913 = vunpack.c.l.b16 %v247
    %v914 = vunpack.c.h.b16 %v247
    %v915 = vunpack.c.l.b16 %v248
    %v916 = vunpack.c.h.b16 %v248
    %v917 = vunpack.c.l.b16 %v249
    %v918 = vunpack.c.h.b16 %v249
    %v919 = vunpack.c.l.b16 %v250
    %v920 = vunpack.c.h.b16 %v250
    %v921 = vunpack.c.l.b16 %v251
    %v922 = vunpack.c.h.b16 %v251
    %v923 = vunpack.c.l.b16 %v252
    %v924 = vunpack.c.h.b16 %v252
    %v925 = vunpack.c.l.b16 %v253
    %v926 = vunpack.c.h.b16 %v253
    %v927 = vunpack.c.l.b16 %v254
    %v928 = vunpack.c.h.b16 %v254
    %v929 = vunpack.c.l.b16 %v255
    %v930 = vunpack.c.h.b16 %v255
    %v931 = vunpack.c.l.b16 %v256
    %v932 = vunpack.c.h.b16 %v256
    %v933 = vunpack.c.l.b16 %v257
    %v934 = vunpack.c.h.b16 %v257
    %v935 = vunpack.c.l.b16 %v258
    %v936 = vunpack.c.h.b16 %v258
    %v937 = vunpack.c.l.b16 %v259
    %v938 = vunpack.c.h.b16 %v259
    %v939 = vunpack.c.l.b16 %v260
    %v940 = vunpack.c.h.b16 %v260
    %v941 = vunpack.c.l.b16 %v261
    %v942 = vunpack.c.h.b16 %v261
    %v943 = vunpack.c.l.b16 %v262
    %v944 = vunpack.c.h.b16 %v262
    %v945 = vunpack.c.l.b16 %v263
    %v946 = vunpack.c.h.b16 %v263
    %v947 = vunpack.c.l.b16 %v264
    %v948 = vunpack.c.h.b16 %v264
    %v949 = vunpack.c.l.b16 %v265
    %v950 = vunpack.c.h.b16 %v265
    %v951 = vunpack.c.l.b16 %v266
    %v952 = vunpack.c.h.b16 %v266
    %v953 = vunpack.c.l.b16 %v267
    %v954 = vunpack.c.h.b16 %v267
    %v955 = vunpack.c.l.b16 %v268
    %v956 = vunpack.c.h.b16 %v268
    %v957 = vunpack.c.l.b16 %v269
    %v958 = vunpack.c.h.b16 %v269
    %v959 = vunpack.c.l.b16 %v270
    %v960 = vunpack.c.h.b16 %v270
    %v961 = vunpack.c.l.b16 %v271
    %v962 = vunpack.c.h.b16 %v271
    %v963 = vunpack.c.l.b16 %v272
    %v964 = vunpack.c.h.b16 %v272
    %v965 = vunpack.c.l.b16 %v273
    %v966 = vunpack.c.h.b16 %v273
    %v967 = vunpack.c.l.b16 %v274
    %v968 = vunpack.c.h.b16 %v274
    %v969 = vunpack.c.l.b16 %v275
    %v970 = vunpack.c.h.b16 %v275
    %v971 = vunpack.c.l.b16 %v276
    %v972 = vunpack.c.h.b16 %v276
    %v973 = vunpack.c.l.b16 %v277
    %v974 = vunpack.c.h.b16 %v277
    %v975 = vunpack.c.l.b16 %v278
    %v976 = vunpack.c.h.b16 %v278
    %v977 = vunpack.c.l.b16 %v279
    %v978 = vunpack.c.h.b16 %v279
    %v979 = vunpack.c.l.b16 %v280
    %v980 = vunpack.c.h.b16 %v280
    %v981 = vunpack.c.l.b16 %v281
    %v982 = vunpack.c.h.b16 %v281
    %v983 = vunpack.c.l.b16 %v282
    %v984 = vunpack.c.h.b16 %v282
    %v985 = vunpack.c.l.b16 %v283
    %v986 = vunpack.c.h.b16 %v283
    %v987 = vunpack.c.l.b16 %v284
    %v988 = vunpack.c.h.b16 %v284
    %v989 = vunpack.c.l.b16 %v285
    %v990 = vunpack.c.h.b16 %v285
    %v991 = vunpack.c.l.b16 %v286
    %v992 = vunpack.c.h.b16 %v286
    %v993 = vunpack.c.l.b16 %v287
    %v994 = vunpack.c.h.b16 %v287
    %v995 = vunpack.c.l.b16 %v288
    %v996 = vunpack.c.h.b16 %v288
    %v997 = vunpack.c.l.b16 %v289
    %v998 = vunpack.c.h.b16 %v289
    %v999 = vunpack.c.l.b16 %v290
    %v1000 = vunpack.c.h.b16 %v290
    %v1001 = vunpack.c.l.b16 %v291
    %v1002 = vunpack.c.h.b16 %v291
    %v1003 = vunpack.c.l.b16 %v292
    %v1004 = vunpack.c.h.b16 %v292
    %v1005 = vunpack.c.l.b16 %v293
    %v1006 = vunpack.c.h.b16 %v293
    %v1007 = vunpack.c.l.b16 %v294
    %v1008 = vunpack.c.h.b16 %v294
    %v1009 = vunpack.c.l.b16 %v295
    %v1010 = vunpack.c.h.b16 %v295
    %v1011 = vunpack.c.l.b16 %v296
    %v1012 = vunpack.c.h.b16 %v296
    %v1013 = vunpack.c.l.b16 %v297
    %v1014 = vunpack.c.h.b16 %v297
    %v1015 = vunpack.c.l.b16 %v298
    %v1016 = vunpack.c.h.b16 %v298
    %v1017 = vunpack.c.l.b16 %v299
    %v1018 = vunpack.c.h.b16 %v299
    %v1019 = vunpack.c.l.b16 %v300
    %v1020 = vunpack.c.h.b16 %v300
    %v1021 = vunpack.c.l.b16 %v301
    %v1022 = vunpack.c.h.b16 %v301
    %v1023 = vunpack.c.l.b16 %v302
    %v1024 = vunpack.c.h.b16 %v302
    %v1025 = vunpack.c.l.b16 %v303
    %v1026 = vunpack.c.h.b16 %v303
    %v1027 = vunpack.c.l.b16 %v304
    %v1028 = vunpack.c.h.b16 %v304
    %v1029 = vunpack.c.l.b16 %v305
    %v1030 = vunpack.c.h.b16 %v305
    %v1031 = vunpack.c.l.b16 %v306
    %v1032 = vunpack.c.h.b16 %v306
    %v1033 = vunpack.c.l.b16 %v307
    %v1034 = vunpack.c.h.b16 %v307
    %v1035 = vunpack.c.l.b16 %v308
    %v1036 = vunpack.c.h.b16 %v308
    %v1037 = vunpack.c.l.b16 %v309
    %v1038 = vunpack.c.h.b16 %v309
    %v1039 = vunpack.c.l.b16 %v310
    %v1040 = vunpack.c.h.b16 %v310
    %v1041 = vunpack.c.l.b16 %v311
    %v1042 = vunpack.c.h.b16 %v311
    %v1043 = vunpack.c.l.b16 %v312
    %v1044 = vunpack.c.h.b16 %v312
    %v1045 = vunpack.c.l.b16 %v313
    %v1046 = vunpack.c.h.b16 %v313
    %v1047 = vunpack.c.l.b16 %v314
    %v1048 = vunpack.c.h.b16 %v314
    %v1049 = vunpack.c.l.b16 %v315
    %v1050 = vunpack.c.h.b16 %v315
    %v1051 = vunpack.c.l.b16 %v316
    %v1052 = vunpack.c.h.b16 %v316
    %v1053 = vunpack.c.l.b16 %v317
    %v1054 = vunpack.c.h.b16 %v317
    %v1055 = vunpack.c.l.b16 %v318
    %v1056 = vunpack.c.h.b16 %v318
    %v1057 = vunpack.c.l.b16 %v319
    %v1058 = vunpack.c.h.b16 %v319
    %v1059 = vunpack.c.l.b16 %v320
    %v1060 = vunpack.c.h.b16 %v320
    %v1061 = vunpack.c.l.b16 %v321
    %v1062 = vunpack.c.h.b16 %v321
    %v1063 = vunpack.c.l.b16 %v322
    %v1064 = vunpack.c.h.b16 %v322
    %v1065 = vunpack.c.l.b16 %v323
    %v1066 = vunpack.c.h.b16 %v323
    %v1067 = vunpack.c.l.b16 %v324
    %v1068 = vunpack.c.h.b16 %v324
    %v1069 = vunpack.c.l.b16 %v325
    %v1070 = vunpack.c.h.b16 %v325
    %v1071 = vunpack.c.l.b16 %v326
    %v1072 = vunpack.c.h.b16 %v326
    %v1073 = vunpack.c.l.b16 %v327
    %v1074 = vunpack.c.h.b16 %v327
    %v1075 = vunpack.c.l.b16 %v328
    %v1076 = vunpack.c.h.b16 %v328
    %v1077 = vunpack.c.l.b16 %v329
    %v1078 = vunpack.c.h.b16 %v329
    %v1079 = vunpack.c.l.b16 %v330
    %v1080 = vunpack.c.h.b16 %v330
    %v1081 = vunpack.c.l.b16 %v331
    %v1082 = vunpack.c.h.b16 %v331
    %v1083 = vunpack.c.l.b16 %v332
    %v1084 = vunpack.c.h.b16 %v332
    %v1085 = vunpack.c.l.b16 %v333
    %v1086 = vunpack.c.h.b16 %v333
    %v1087 = vunpack.c.l.b16 %v334
    %v1088 = vunpack.c.h.b16 %v334
    %v1089 = vunpack.c.l.b16 %v335
    %v1090 = vunpack.c.h.b16 %v335
    %v1091 = vunpack.c.l.b16 %v336
    %v1092 = vunpack.c.h.b16 %v336
    %v1093 = vunpack.c.l.b16 %v337
    %v1094 = vunpack.c.h.b16 %v337
    %v1095 = vunpack.c.l.b16 %v338
    %v1096 = vunpack.c.h.b16 %v338
    %v1097 = vunpack.c.l.b16 %v339
    %v1098 = vunpack.c.h.b16 %v339
    %v1099 = vunpack.c.l.b16 %v340
    %v1100 = vunpack.c.h.b16 %v340
    %v1101 = vunpack.c.l.b16 %v341
    %v1102 = vunpack.c.h.b16 %v341
    %v1103 = vunpack.c.l.b16 %v342
    %v1104 = vunpack.c.h.b16 %v342
    %v1105 = vunpack.c.l.b16 %v343
    %v1106 = vunpack.c.h.b16 %v343
    %v1107 = vunpack.c.l.b16 %v344
    %v1108 = vunpack.c.h.b16 %v344
    %v1109 = vunpack.c.l.b16 %v345
    %v1110 = vunpack.c.h.b16 %v345
    %v1111 = vunpack.c.l.b16 %v346
    %v1112 = vunpack.c.h.b16 %v346
    %v1113 = vunpack.c.l.b16 %v347
    %v1114 = vunpack.c.h.b16 %v347
    %v1115 = vunpack.c.l.b16 %v348
    %v1116 = vunpack.c.h.b16 %v348
    %v1117 = vunpack.c.l.b16 %v349
    %v1118 = vunpack.c.h.b16 %v349
    %v1119 = vunpack.c.l.b16 %v350
    %v1120 = vunpack.c.h.b16 %v350
    %v1121 = vunpack.c.l.b16 %v351
    %v1122 = vunpack.c.h.b16 %v351
    %v1123 = vunpack.c.l.b16 %v352
    %v1124 = vunpack.c.h.b16 %v352
    %v1125 = vunpack.c.l.b16 %v353
    %v1126 = vunpack.c.h.b16 %v353
    %v1127 = vunpack.c.l.b16 %v354
    %v1128 = vunpack.c.h.b16 %v354
    %v1129 = vunpack.c.l.b16 %v355
    %v1130 = vunpack.c.h.b16 %v355
    %v1131 = vunpack.c.l.b16 %v356
    %v1132 = vunpack.c.h.b16 %v356
    %v1133 = vunpack.c.l.b16 %v357
    %v1134 = vunpack.c.h.b16 %v357
    %v1135 = vunpack.c.l.b16 %v358
    %v1136 = vunpack.c.h.b16 %v358
    %v1137 = vunpack.c.l.b16 %v359
    %v1138 = vunpack.c.h.b16 %v359
    %v1139 = vunpack.c.l.b16 %v360
    %v1140 = vunpack.c.h.b16 %v360
    %v1141 = vunpack.c.l.b16 %v361
    %v1142 = vunpack.c.h.b16 %v361
    %v1143 = vunpack.c.l.b16 %v362
    %v1144 = vunpack.c.h.b16 %v362
    %v1145 = vunpack.c.l.b16 %v363
    %v1146 = vunpack.c.h.b16 %v363
    %v1147 = vunpack.c.l.b16 %v364
    %v1148 = vunpack.c.h.b16 %v364
    %v1149 = vunpack.c.l.b16 %v365
    %v1150 = vunpack.c.h.b16 %v365
    %v1151 = vunpack.c.l.b16 %v366
    %v1152 = vunpack.c.h.b16 %v366
    %v1153 = vunpack.c.l.b16 %v367
    %v1154 = vunpack.c.h.b16 %v367
    %v1155 = vunpack.c.l.b16 %v368
    %v1156 = vunpack.c.h.b16 %v368
    %v1157 = vunpack.c.l.b16 %v369
    %v1158 = vunpack.c.h.b16 %v369
    %v1159 = vunpack.c.l.b16 %v370
    %v1160 = vunpack.c.h.b16 %v370
    %v1161 = vpack.c.b16 %v653, %v649
    %v1162 = vpack.c.b16 %v654, %v650
    %v1163 = vpack.c.b16 %v655, %v651
    %v1164 = vpack.c.b16 %v656, %v652
    %v1165 = vpack.c.b16 %v661, %v657
    %v1166 = vpack.c.b16 %v662, %v658
    %v1167 = vpack.c.b16 %v663, %v659
    %v1168 = vpack.c.b16 %v664, %v660
    %v1169 = vpack.c.b16 %v669, %v665
    %v1170 = vpack.c.b16 %v670, %v666
    %v1171 = vpack.c.b16 %v671, %v667
    %v1172 = vpack.c.b16 %v672, %v668
    %v1173 = vpack.c.b16 %v677, %v673
    %v1174 = vpack.c.b16 %v678, %v674
    %v1175 = vpack.c.b16 %v679, %v675
    %v1176 = vpack.c.b16 %v680, %v676
    %v1177 = vpack.c.b16 %v685, %v681
    %v1178 = vpack.c.b16 %v686, %v682
    %v1179 = vpack.c.b16 %v687, %v683
    %v1180 = vpack.c.b16 %v688, %v684
    %v1181 = vpack.c.b16 %v693, %v689
    %v1182 = vpack.c.b16 %v694, %v690
    %v1183 = vpack.c.b16 %v695, %v691
    %v1184 = vpack.c.b16 %v696, %v692
    %v1185 = vpack.c.b16 %v701, %v697
    %v1186 = vpack.c.b16 %v702, %v698
    %v1187 = vpack.c.b16 %v703, %v699
    %v1188 = vpack.c.b16 %v704, %v700
    %v1189 = vpack.c.b16 %v709, %v705
    %v1190 = vpack.c.b16 %v710, %v706
    %v1191 = vpack.c.b16 %v711, %v707
    %v1192 = vpack.c.b16 %v712, %v708
    %v1193 = vpack.c.b16 %v717, %v713
    %v1194 = vpack.c.b16 %v718, %v714
    %v1195 = vpack.c.b16 %v719, %v715
    %v1196 = vpack.c.b16 %v720, %v716
    %v1197 = vpack.c.b16 %v725, %v721
    %v1198 = vpack.c.b16 %v726, %v722
    %v1199 = vpack.c.b16 %v727, %v723
    %v1200 = vpack.c.b16 %v728, %v724
    %v1201 = vpack.c.b16 %v733, %v729
    %v1202 = vpack.c.b16 %v734, %v730
    %v1203 = vpack.c.b16 %v735, %v731
    %v1204 = vpack.c.b16 %v736, %v732
    %v1205 = vpack.c.b16 %v741, %v737
    %v1206 = vpack.c.b16 %v742, %v738
    %v1207 = vpack.c.b16 %v743, %v739
    %v1208 = vpack.c.b16 %v744, %v740
    %v1209 = vpack.c.b16 %v749, %v745
    %v1210 = vpack.c.b16 %v750, %v746
    %v1211 = vpack.c.b16 %v751, %v747
    %v1212 = vpack.c.b16 %v752, %v748
    %v1213 = vpack.c.b16 %v757, %v753
    %v1214 = vpack.c.b16 %v758, %v754
    %v1215 = vpack.c.b16 %v759, %v755
    %v1216 = vpack.c.b16 %v760, %v756
    %v1217 = vpack.c.b16 %v765, %v761
    %v1218 = vpack.c.b16 %v766, %v762
    %v1219 = vpack.c.b16 %v767, %v763
    %v1220 = vpack.c.b16 %v768, %v764
    %v1221 = vpack.c.b16 %v773, %v769
    %v1222 = vpack.c.b16 %v774, %v770
    %v1223 = vpack.c.b16 %v775, %v771
    %v1224 = vpack.c.b16 %v776, %v772
    %v1225 = vpack.c.b16 %v781, %v777
    %v1226 = vpack.c.b16 %v782, %v778
    %v1227 = vpack.c.b16 %v783, %v779
    %v1228 = vpack.c.b16 %v784, %v780
    %v1229 = vpack.c.b16 %v789, %v785
    %v1230 = vpack.c.b16 %v790, %v786
    %v1231 = vpack.c.b16 %v791, %v787
    %v1232 = vpack.c.b16 %v792, %v788
    %v1233 = vpack.c.b16 %v797, %v793
    %v1234 = vpack.c.b16 %v798, %v794
    %v1235 = vpack.c.b16 %v799, %v795
    %v1236 = vpack.c.b16 %v800, %v796
    %v1237 = vpack.c.b16 %v805, %v801
    %v1238 = vpack.c.b16 %v806, %v802
    %v1239 = vpack.c.b16 %v807, %v803
    %v1240 = vpack.c.b16 %v808, %v804
    %v1241 = vpack.c.b16 %v813, %v809
    %v1242 = vpack.c.b16 %v814, %v810
    %v1243 = vpack.c.b16 %v815, %v811
    %v1244 = vpack.c.b16 %v816, %v812
    %v1245 = vpack.c.b16 %v821, %v817
    %v1246 = vpack.c.b16 %v822, %v818
    %v1247 = vpack.c.b16 %v823, %v819
    %v1248 = vpack.c.b16 %v824, %v820
    %v1249 = vpack.c.b16 %v829, %v825
    %v1250 = vpack.c.b16 %v830, %v826
    %v1251 = vpack.c.b16 %v831, %v827
    %v1252 = vpack.c.b16 %v832, %v828
    %v1253 = vpack.c.b16 %v837, %v833
    %v1254 = vpack.c.b16 %v838, %v834
    %v1255 = vpack.c.b16 %v839, %v835
    %v1256 = vpack.c.b16 %v840, %v836
    %v1257 = vpack.c.b16 %v845, %v841
    %v1258 = vpack.c.b16 %v846, %v842
    %v1259 = vpack.c.b16 %v847, %v843
    %v1260 = vpack.c.b16 %v848, %v844
    %v1261 = vpack.c.b16 %v853, %v849
    %v1262 = vpack.c.b16 %v854, %v850
    %v1263 = vpack.c.b16 %v855, %v851
    %v1264 = vpack.c.b16 %v856, %v852
    %v1265 = vpack.c.b16 %v861, %v857
    %v1266 = vpack.c.b16 %v862, %v858
    %v1267 = vpack.c.b16 %v863, %v859
    %v1268 = vpack.c.b16 %v864, %v860
    %v1269 = vpack.c.b16 %v869, %v865
    %v1270 = vpack.c.b16 %v870, %v866
    %v1271 = vpack.c.b16 %v871, %v867
    %v1272 = vpack.c.b16 %v872, %v868
    %v1273 = vpack.c.b16 %v877, %v873
    %v1274 = vpack.c.b16 %v878, %v874
    %v1275 = vpack.c.b16 %v879, %v875
    %v1276 = vpack.c.b16 %v880, %v876
    %v1277 = vpack.c.b16 %v885, %v881
    %v1278 = vpack.c.b16 %v886, %v882
    %v1279 = vpack.c.b16 %v887, %v883
    %v1280 = vpack.c.b16 %v888, %v884
    %v1281 = vpack.c.b16 %v893, %v889
    %v1282 = vpack.c.b16 %v894, %v890
    %v1283 = vpack.c.b16 %v895, %v891
    %v1284 = vpack.c.b16 %v896, %v892
    %v1285 = vpack.c.b16 %v901, %v897
    %v1286 = vpack.c.b16 %v902, %v898
    %v1287 = vpack.c.b16 %v903, %v899
    %v1288 = vpack.c.b16 %v904, %v900
    %v1289 = vpack.c.b16 %v909, %v905
    %v1290 = vpack.c.b16 %v910, %v906
    %v1291 = vpack.c.b16 %v911, %v907
    %v1292 = vpack.c.b16 %v912, %v908
    %v1293 = vpack.c.b16 %v917, %v913
    %v1294 = vpack.c.b16 %v918, %v914
    %v1295 = vpack.c.b16 %v919, %v915
    %v1296 = vpack.c.b16 %v920, %v916
    %v1297 = vpack.c.b16 %v925, %v921
    %v1298 = vpack.c.b16 %v926, %v922
    %v1299 = vpack.c.b16 %v927, %v923
    %v1300 = vpack.c.b16 %v928, %v924
    %v1301 = vpack.c.b16 %v933, %v929
    %v1302 = vpack.c.b16 %v934, %v930
    %v1303 = vpack.c.b16 %v935, %v931
    %v1304 = vpack.c.b16 %v936, %v932
    %v1305 = vpack.c.b16 %v941, %v937
    %v1306 = vpack.c.b16 %v942, %v938
    %v1307 = vpack.c.b16 %v943, %v939
    %v1308 = vpack.c.b16 %v944, %v940
    %v1309 = vpack.c.b16 %v949, %v945
    %v1310 = vpack.c.b16 %v950, %v946
    %v1311 = vpack.c.b16 %v951, %v947
    %v1312 = vpack.c.b16 %v952, %v948
    %v1313 = vpack.c.b16 %v957, %v953
    %v1314 = vpack.c.b16 %v958, %v954
    %v1315 = vpack.c.b16 %v959, %v955
    %v1316 = vpack.c.b16 %v960, %v956
    %v1317 = vpack.c.b16 %v965, %v961
    %v1318 = vpack.c.b16 %v966, %v962
    %v1319 = vpack.c.b16 %v967, %v963
    %v1320 = vpack.c.b16 %v968, %v964
    %v1321 = vpack.c.b16 %v973, %v969
    %v1322 = vpack.c.b16 %v974, %v970
    %v1323 = vpack.c.b16 %v975, %v971
    %v1324 = vpack.c.b16 %v976, %v972
    %v1325 = vpack.c.b16 %v981, %v977
    %v1326 = vpack.c.b16 %v982, %v978
    %v1327 = vpack.c.b16 %v983, %v979
    %v1328 = vpack.c.b16 %v984, %v980
    %v1329 = vpack.c.b16 %v989, %v985
    %v1330 = vpack.c.b16 %v990, %v986
    %v1331 = vpack.c.b16 %v991, %v987
    %v1332 = vpack.c.b16 %v992, %v988
    %v1333 = vpack.c.b16 %v997, %v993
    %v1334 = vpack.c.b16 %v998, %v994
    %v1335 = vpack.c.b16 %v999, %v995
    %v1336 = vpack.c.b16 %v1000, %v996
    %v1337 = vpack.c.b16 %v1005, %v1001
    %v1338 = vpack.c.b16 %v1006, %v1002
    %v1339 = vpack.c.b16 %v1007, %v1003
    %v1340 = vpack.c.b16 %v1008, %v1004
    %v1341 = vpack.c.b16 %v1013, %v1009
    %v1342 = vpack.c.b16 %v1014, %v1010
    %v1343 = vpack.c.b16 %v1015, %v1011
    %v1344 = vpack.c.b16 %v1016, %v1012
    %v1345 = vpack.c.b16 %v1021, %v1017
    %v1346 = vpack.c.b16 %v1022, %v1018
    %v1347 = vpack.c.b16 %v1023, %v1019
    %v1348 = vpack.c.b16 %v1024, %v1020
    %v1349 = vpack.c.b16 %v1029, %v1025
    %v1350 = vpack.c.b16 %v1030, %v1026
    %v1351 = vpack.c.b16 %v1031, %v1027
    %v1352 = vpack.c.b16 %v1032, %v1028
    %v1353 = vpack.c.b16 %v1037, %v1033
    %v1354 = vpack.c.b16 %v1038, %v1034
    %v1355 = vpack.c.b16 %v1039, %v1035
    %v1356 = vpack.c.b16 %v1040, %v1036
    %v1357 = vpack.c.b16 %v1045, %v1041
    %v1358 = vpack.c.b16 %v1046, %v1042
    %v1359 = vpack.c.b16 %v1047, %v1043
    %v1360 = vpack.c.b16 %v1048, %v1044
    %v1361 = vpack.c.b16 %v1053, %v1049
    %v1362 = vpack.c.b16 %v1054, %v1050
    %v1363 = vpack.c.b16 %v1055, %v1051
    %v1364 = vpack.c.b16 %v1056, %v1052
    %v1365 = vpack.c.b16 %v1061, %v1057
    %v1366 = vpack.c.b16 %v1062, %v1058
    %v1367 = vpack.c.b16 %v1063, %v1059
    %v1368 = vpack.c.b16 %v1064, %v1060
    %v1369 = vpack.c.b16 %v1069, %v1065
    %v1370 = vpack.c.b16 %v1070, %v1066
    %v1371 = vpack.c.b16 %v1071, %v1067
    %v1372 = vpack.c.b16 %v1072, %v1068
    %v1373 = vpack.c.b16 %v1077, %v1073
    %v1374 = vpack.c.b16 %v1078, %v1074
    %v1375 = vpack.c.b16 %v1079, %v1075
    %v1376 = vpack.c.b16 %v1080, %v1076
    %v1377 = vpack.c.b16 %v1085, %v1081
    %v1378 = vpack.c.b16 %v1086, %v1082
    %v1379 = vpack.c.b16 %v1087, %v1083
    %v1380 = vpack.c.b16 %v1088, %v1084
    %v1381 = vpack.c.b16 %v1093, %v1089
    %v1382 = vpack.c.b16 %v1094, %v1090
    %v1383 = vpack.c.b16 %v1095, %v1091
    %v1384 = vpack.c.b16 %v1096, %v1092
    %v1385 = vpack.c.b16 %v1101, %v1097
    %v1386 = vpack.c.b16 %v1102, %v1098
    %v1387 = vpack.c.b16 %v1103, %v1099
    %v1388 = vpack.c.b16 %v1104, %v1100
    %v1389 = vpack.c.b16 %v1109, %v1105
    %v1390 = vpack.c.b16 %v1110, %v1106
    %v1391 = vpack.c.b16 %v1111, %v1107
    %v1392 = vpack.c.b16 %v1112, %v1108
    %v1393 = vpack.c.b16 %v1117, %v1113
    %v1394 = vpack.c.b16 %v1118, %v1114
    %v1395 = vpack.c.b16 %v1119, %v1115
    %v1396 = vpack.c.b16 %v1120, %v1116
    %v1397 = vpack.c.b16 %v1125, %v1121
    %v1398 = vpack.c.b16 %v1126, %v1122
    %v1399 = vpack.c.b16 %v1127, %v1123
    %v1400 = vpack.c.b16 %v1128, %v1124
    %v1401 = vpack.c.b16 %v1133, %v1129
    %v1402 = vpack.c.b16 %v1134, %v1130
    %v1403 = vpack.c.b16 %v1135, %v1131
    %v1404 = vpack.c.b16 %v1136, %v1132
    %v1405 = vpack.c.b16 %v1141, %v1137
    %v1406 = vpack.c.b16 %v1142, %v1138
    %v1407 = vpack.c.b16 %v1143, %v1139
    %v1408 = vpack.c.b16 %v1144, %v1140
    %v1409 = vpack.c.b16 %v1149, %v1145
    %v1410 = vpack.c.b16 %v1150, %v1146
    %v1411 = vpack.c.b16 %v1151, %v1147
    %v1412 = vpack.c.b16 %v1152, %v1148
    %v1413 = vpack.c.b16 %v1157, %v1153
    %v1414 = vpack.c.b16 %v1158, %v1154
    %v1415 = vpack.c.b16 %v1159, %v1155
    %v1416 = vpack.c.b16 %v1160, %v1156
    %1673 = vmatprep.subr.bf16.mxu0 %v1190
    %1674 = vmatpush1.bf16.msra.mxu0 %v1189
    %1675 = vmatprep.subr.bf16.mxu0 %v1186
    %1676 = vmatpush1.bf16.msra.mxu0 %v1185
    %1677 = vmatprep.subr.bf16.mxu0 %v1182
    %1678 = vmatpush1.bf16.msra.mxu0 %v1181
    %1679 = vmatprep.subr.bf16.mxu0 %v1178
    %1680 = vmatpush1.bf16.msra.mxu0 %v1177
    %1681 = vmatprep.subr.bf16.mxu0 %v1174
    %1682 = vmatpush1.bf16.msra.mxu0 %v1173
    %1683 = vmatprep.subr.bf16.mxu0 %v1170
    %1684 = vmatpush1.bf16.msra.mxu0 %v1169
    %1685 = vmatprep.subr.bf16.mxu0 %v1166
    %1686 = vmatpush1.bf16.msra.mxu0 %v1165
    %1687 = vmatprep.subr.bf16.mxu0 %v1162
    %1688 = vmatpush1.bf16.msra.mxu0 %v1161
    %1689 = vmatprep.subr.bf16.mxu0 %v1222
    %1690 = vmatpush2.bf16.msra.mxu0 %v1221
    %1691 = vmatprep.subr.bf16.mxu0 %v1218
    %1692 = vmatpush2.bf16.msra.mxu0 %v1217
    %1693 = vmatprep.subr.bf16.mxu0 %v1214
    %1694 = vmatpush2.bf16.msra.mxu0 %v1213
    %1695 = vmatprep.subr.bf16.mxu0 %v1210
    %1696 = vmatpush2.bf16.msra.mxu0 %v1209
    %1697 = vmatprep.subr.bf16.mxu0 %v1206
    %1698 = vmatpush2.bf16.msra.mxu0 %v1205
    %1699 = vmatprep.subr.bf16.mxu0 %v1202
    %1700 = vmatpush2.bf16.msra.mxu0 %v1201
    %1701 = vmatprep.subr.bf16.mxu0 %v1198
    %1702 = vmatpush2.bf16.msra.mxu0 %v1197
    %1703 = vmatprep.subr.bf16.mxu0 %v1194
    %1704 = vmatpush2.bf16.msra.mxu0 %v1193
    %1705 = vmatprep.mubr.bf16.mxu0 %v108
    %1706 = vmatmul.mubr.bf16.gmra.mxu0 %v107
    %v1707 = vpop.f32.mrf.mxu0
    %v1708 = vadd.f32 %v376, %v1707
    %v1709 = vpop.f32.mrf.mxu0
    %v1710 = vadd.f32 %v380, %v1709
    %v1711 = vpop.f32.mrf.mxu0
    %v1712 = vadd.f32 %v376, %v1711
    %v1713 = vpop.f32.mrf.mxu0
    %v1714 = vadd.f32 %v380, %v1713
    %1715 = vdwg.mxu0
    %1716 = vmatprep.subr.bf16.mxu0 %v1254
    %1717 = vmatpush1.bf16.msra.mxu0 %v1253
    %1718 = vmatprep.subr.bf16.mxu0 %v1250
    %1719 = vmatpush1.bf16.msra.mxu0 %v1249
    %1720 = vmatprep.subr.bf16.mxu0 %v1246
    %1721 = vmatpush1.bf16.msra.mxu0 %v1245
    %1722 = vmatprep.subr.bf16.mxu0 %v1242
    %1723 = vmatpush1.bf16.msra.mxu0 %v1241
    %1724 = vmatprep.subr.bf16.mxu0 %v1238
    %1725 = vmatpush1.bf16.msra.mxu0 %v1237
    %1726 = vmatprep.subr.bf16.mxu0 %v1234
    %1727 = vmatpush1.bf16.msra.mxu0 %v1233
    %1728 = vmatprep.subr.bf16.mxu0 %v1230
    %1729 = vmatpush1.bf16.msra.mxu0 %v1229
    %1730 = vmatprep.subr.bf16.mxu0 %v1226
    %1731 = vmatpush1.bf16.msra.mxu0 %v1225
    %1732 = vmatprep.subr.bf16.mxu0 %v1286
    %1733 = vmatpush2.bf16.msra.mxu0 %v1285
    %1734 = vmatprep.subr.bf16.mxu0 %v1282
    %1735 = vmatpush2.bf16.msra.mxu0 %v1281
    %1736 = vmatprep.subr.bf16.mxu0 %v1278
    %1737 = vmatpush2.bf16.msra.mxu0 %v1277
    %1738 = vmatprep.subr.bf16.mxu0 %v1274
    %1739 = vmatpush2.bf16.msra.mxu0 %v1273
    %1740 = vmatprep.subr.bf16.mxu0 %v1270
    %1741 = vmatpush2.bf16.msra.mxu0 %v1269
    %1742 = vmatprep.subr.bf16.mxu0 %v1266
    %1743 = vmatpush2.bf16.msra.mxu0 %v1265
    %1744 = vmatprep.subr.bf16.mxu0 %v1262
    %1745 = vmatpush2.bf16.msra.mxu0 %v1261
    %1746 = vmatprep.subr.bf16.mxu0 %v1258
    %1747 = vmatpush2.bf16.msra.mxu0 %v1257
    %1748 = vmatprep.mubr.bf16.mxu0 %v110
    %1749 = vmatmul.mubr.bf16.gmra.mxu0 %v109
    %v1750 = vpop.f32.mrf.mxu0
    %v1751 = vadd.f32 %v1708, %v1750
    %v1752 = vpop.f32.mrf.mxu0
    %v1753 = vadd.f32 %v1710, %v1752
    %v1754 = vpop.f32.mrf.mxu0
    %v1755 = vadd.f32 %v1712, %v1754
    %v1756 = vpop.f32.mrf.mxu0
    %v1757 = vadd.f32 %v1714, %v1756
    %1758 = vdwg.mxu0
    %1759 = vmatprep.subr.bf16.mxu0 %v1318
    %1760 = vmatpush1.bf16.msra.mxu0 %v1317
    %1761 = vmatprep.subr.bf16.mxu0 %v1314
    %1762 = vmatpush1.bf16.msra.mxu0 %v1313
    %1763 = vmatprep.subr.bf16.mxu0 %v1310
    %1764 = vmatpush1.bf16.msra.mxu0 %v1309
    %1765 = vmatprep.subr.bf16.mxu0 %v1306
    %1766 = vmatpush1.bf16.msra.mxu0 %v1305
    %1767 = vmatprep.subr.bf16.mxu0 %v1302
    %1768 = vmatpush1.bf16.msra.mxu0 %v1301
    %1769 = vmatprep.subr.bf16.mxu0 %v1298
    %1770 = vmatpush1.bf16.msra.mxu0 %v1297
    %1771 = vmatprep.subr.bf16.mxu0 %v1294
    %1772 = vmatpush1.bf16.msra.mxu0 %v1293
    %1773 = vmatprep.subr.bf16.mxu0 %v1290
    %1774 = vmatpush1.bf16.msra.mxu0 %v1289
    %1775 = vmatprep.subr.bf16.mxu0 %v1350
    %1776 = vmatpush2.bf16.msra.mxu0 %v1349
    %1777 = vmatprep.subr.bf16.mxu0 %v1346
    %1778 = vmatpush2.bf16.msra.mxu0 %v1345
    %1779 = vmatprep.subr.bf16.mxu0 %v1342
    %1780 = vmatpush2.bf16.msra.mxu0 %v1341
    %1781 = vmatprep.subr.bf16.mxu0 %v1338
    %1782 = vmatpush2.bf16.msra.mxu0 %v1337
    %1783 = vmatprep.subr.bf16.mxu0 %v1334
    %1784 = vmatpush2.bf16.msra.mxu0 %v1333
    %1785 = vmatprep.subr.bf16.mxu0 %v1330
    %1786 = vmatpush2.bf16.msra.mxu0 %v1329
    %1787 = vmatprep.subr.bf16.mxu0 %v1326
    %1788 = vmatpush2.bf16.msra.mxu0 %v1325
    %1789 = vmatprep.subr.bf16.mxu0 %v1322
    %1790 = vmatpush2.bf16.msra.mxu0 %v1321
    %1791 = vmatprep.mubr.bf16.mxu0 %v112
    %1792 = vmatmul.mubr.bf16.gmra.mxu0 %v111
    %v1793 = vpop.f32.mrf.mxu0
    %v1794 = vadd.f32 %v1751, %v1793
    %v1795 = vpop.f32.mrf.mxu0
    %v1796 = vadd.f32 %v1753, %v1795
    %v1797 = vpop.f32.mrf.mxu0
    %v1798 = vadd.f32 %v1755, %v1797
    %v1799 = vpop.f32.mrf.mxu0
    %v1800 = vadd.f32 %v1757, %v1799
    %1801 = vdwg.mxu0
    %1802 = vmatprep.subr.bf16.mxu0 %v1382
    %1803 = vmatpush1.bf16.msra.mxu0 %v1381
    %1804 = vmatprep.subr.bf16.mxu0 %v1378
    %1805 = vmatpush1.bf16.msra.mxu0 %v1377
    %1806 = vmatprep.subr.bf16.mxu0 %v1374
    %1807 = vmatpush1.bf16.msra.mxu0 %v1373
    %1808 = vmatprep.subr.bf16.mxu0 %v1370
    %1809 = vmatpush1.bf16.msra.mxu0 %v1369
    %1810 = vmatprep.subr.bf16.mxu0 %v1366
    %1811 = vmatpush1.bf16.msra.mxu0 %v1365
    %1812 = vmatprep.subr.bf16.mxu0 %v1362
    %1813 = vmatpush1.bf16.msra.mxu0 %v1361
    %1814 = vmatprep.subr.bf16.mxu0 %v1358
    %1815 = vmatpush1.bf16.msra.mxu0 %v1357
    %1816 = vmatprep.subr.bf16.mxu0 %v1354
    %1817 = vmatpush1.bf16.msra.mxu0 %v1353
    %1818 = vmatprep.subr.bf16.mxu0 %v1414
    %1819 = vmatpush2.bf16.msra.mxu0 %v1413
    %1820 = vmatprep.subr.bf16.mxu0 %v1410
    %1821 = vmatpush2.bf16.msra.mxu0 %v1409
    %1822 = vmatprep.subr.bf16.mxu0 %v1406
    %1823 = vmatpush2.bf16.msra.mxu0 %v1405
    %1824 = vmatprep.subr.bf16.mxu0 %v1402
    %1825 = vmatpush2.bf16.msra.mxu0 %v1401
    %1826 = vmatprep.subr.bf16.mxu0 %v1398
    %1827 = vmatpush2.bf16.msra.mxu0 %v1397
    %1828 = vmatprep.subr.bf16.mxu0 %v1394
    %1829 = vmatpush2.bf16.msra.mxu0 %v1393
    %1830 = vmatprep.subr.bf16.mxu0 %v1390
    %1831 = vmatpush2.bf16.msra.mxu0 %v1389
    %1832 = vmatprep.subr.bf16.mxu0 %v1386
    %1833 = vmatpush2.bf16.msra.mxu0 %v1385
    %1834 = vmatprep.mubr.bf16.mxu0 %v114
    %1835 = vmatmul.mubr.bf16.gmra.mxu0 %v113
    %v1836 = vpop.f32.mrf.mxu0
    %v1837 = vadd.f32 %v1794, %v1836
    %v1838 = vpop.f32.mrf.mxu0
    %v1839 = vadd.f32 %v1796, %v1838
    %v1840 = vpop.f32.mrf.mxu0
    %v1841 = vadd.f32 %v1798, %v1840
    %v1842 = vpop.f32.mrf.mxu0
    %v1843 = vadd.f32 %v1800, %v1842
    %1844 = vdwg.mxu0
    %1845 = vmatprep.subr.bf16.mxu0 %v1192
    %1846 = vmatpush1.bf16.msra.mxu0 %v1191
    %1847 = vmatprep.subr.bf16.mxu0 %v1188
    %1848 = vmatpush1.bf16.msra.mxu0 %v1187
    %1849 = vmatprep.subr.bf16.mxu0 %v1184
    %1850 = vmatpush1.bf16.msra.mxu0 %v1183
    %1851 = vmatprep.subr.bf16.mxu0 %v1180
    %1852 = vmatpush1.bf16.msra.mxu0 %v1179
    %1853 = vmatprep.subr.bf16.mxu0 %v1176
    %1854 = vmatpush1.bf16.msra.mxu0 %v1175
    %1855 = vmatprep.subr.bf16.mxu0 %v1172
    %1856 = vmatpush1.bf16.msra.mxu0 %v1171
    %1857 = vmatprep.subr.bf16.mxu0 %v1168
    %1858 = vmatpush1.bf16.msra.mxu0 %v1167
    %1859 = vmatprep.subr.bf16.mxu0 %v1164
    %1860 = vmatpush1.bf16.msra.mxu0 %v1163
    %1861 = vmatprep.subr.bf16.mxu0 %v1224
    %1862 = vmatpush2.bf16.msra.mxu0 %v1223
    %1863 = vmatprep.subr.bf16.mxu0 %v1220
    %1864 = vmatpush2.bf16.msra.mxu0 %v1219
    %1865 = vmatprep.subr.bf16.mxu0 %v1216
    %1866 = vmatpush2.bf16.msra.mxu0 %v1215
    %1867 = vmatprep.subr.bf16.mxu0 %v1212
    %1868 = vmatpush2.bf16.msra.mxu0 %v1211
    %1869 = vmatprep.subr.bf16.mxu0 %v1208
    %1870 = vmatpush2.bf16.msra.mxu0 %v1207
    %1871 = vmatprep.subr.bf16.mxu0 %v1204
    %1872 = vmatpush2.bf16.msra.mxu0 %v1203
    %1873 = vmatprep.subr.bf16.mxu0 %v1200
    %1874 = vmatpush2.bf16.msra.mxu0 %v1199
    %1875 = vmatprep.subr.bf16.mxu0 %v1196
    %1876 = vmatpush2.bf16.msra.mxu0 %v1195
    %1877 = vmatprep.mubr.bf16.mxu0 %v108
    %1878 = vmatmul.mubr.bf16.gmra.mxu0 %v107
    %v1879 = vpop.f32.mrf.mxu0
    %v1880 = vadd.f32 %v384, %v1879
    %v1881 = vpop.f32.mrf.mxu0
    %v1882 = vadd.f32 %v388, %v1881
    %v1883 = vpop.f32.mrf.mxu0
    %v1884 = vadd.f32 %v384, %v1883
    %v1885 = vpop.f32.mrf.mxu0
    %v1886 = vadd.f32 %v388, %v1885
    %1887 = vdwg.mxu0
    %1888 = vmatprep.subr.bf16.mxu0 %v1256
    %1889 = vmatpush1.bf16.msra.mxu0 %v1255
    %1890 = vmatprep.subr.bf16.mxu0 %v1252
    %1891 = vmatpush1.bf16.msra.mxu0 %v1251
    %1892 = vmatprep.subr.bf16.mxu0 %v1248
    %1893 = vmatpush1.bf16.msra.mxu0 %v1247
    %1894 = vmatprep.subr.bf16.mxu0 %v1244
    %1895 = vmatpush1.bf16.msra.mxu0 %v1243
    %1896 = vmatprep.subr.bf16.mxu0 %v1240
    %1897 = vmatpush1.bf16.msra.mxu0 %v1239
    %1898 = vmatprep.subr.bf16.mxu0 %v1236
    %1899 = vmatpush1.bf16.msra.mxu0 %v1235
    %1900 = vmatprep.subr.bf16.mxu0 %v1232
    %1901 = vmatpush1.bf16.msra.mxu0 %v1231
    %1902 = vmatprep.subr.bf16.mxu0 %v1228
    %1903 = vmatpush1.bf16.msra.mxu0 %v1227
    %1904 = vmatprep.subr.bf16.mxu0 %v1288
    %1905 = vmatpush2.bf16.msra.mxu0 %v1287
    %1906 = vmatprep.subr.bf16.mxu0 %v1284
    %1907 = vmatpush2.bf16.msra.mxu0 %v1283
    %1908 = vmatprep.subr.bf16.mxu0 %v1280
    %1909 = vmatpush2.bf16.msra.mxu0 %v1279
    %1910 = vmatprep.subr.bf16.mxu0 %v1276
    %1911 = vmatpush2.bf16.msra.mxu0 %v1275
    %1912 = vmatprep.subr.bf16.mxu0 %v1272
    %1913 = vmatpush2.bf16.msra.mxu0 %v1271
    %1914 = vmatprep.subr.bf16.mxu0 %v1268
    %1915 = vmatpush2.bf16.msra.mxu0 %v1267
    %1916 = vmatprep.subr.bf16.mxu0 %v1264
    %1917 = vmatpush2.bf16.msra.mxu0 %v1263
    %1918 = vmatprep.subr.bf16.mxu0 %v1260
    %1919 = vmatpush2.bf16.msra.mxu0 %v1259
    %1920 = vmatprep.mubr.bf16.mxu0 %v110
    %1921 = vmatmul.mubr.bf16.gmra.mxu0 %v109
    %v1922 = vpop.f32.mrf.mxu0
    %v1923 = vadd.f32 %v1880, %v1922
    %v1924 = vpop.f32.mrf.mxu0
    %v1925 = vadd.f32 %v1882, %v1924
    %v1926 = vpop.f32.mrf.mxu0
    %v1927 = vadd.f32 %v1884, %v1926
    %v1928 = vpop.f32.mrf.mxu0
    %v1929 = vadd.f32 %v1886, %v1928
    %1930 = vdwg.mxu0
    %1931 = vmatprep.subr.bf16.mxu0 %v1320
    %1932 = vmatpush1.bf16.msra.mxu0 %v1319
    %1933 = vmatprep.subr.bf16.mxu0 %v1316
    %1934 = vmatpush1.bf16.msra.mxu0 %v1315
    %1935 = vmatprep.subr.bf16.mxu0 %v1312
    %1936 = vmatpush1.bf16.msra.mxu0 %v1311
    %1937 = vmatprep.subr.bf16.mxu0 %v1308
    %1938 = vmatpush1.bf16.msra.mxu0 %v1307
    %1939 = vmatprep.subr.bf16.mxu0 %v1304
    %1940 = vmatpush1.bf16.msra.mxu0 %v1303
    %1941 = vmatprep.subr.bf16.mxu0 %v1300
    %1942 = vmatpush1.bf16.msra.mxu0 %v1299
    %1943 = vmatprep.subr.bf16.mxu0 %v1296
    %1944 = vmatpush1.bf16.msra.mxu0 %v1295
    %1945 = vmatprep.subr.bf16.mxu0 %v1292
    %1946 = vmatpush1.bf16.msra.mxu0 %v1291
    %1947 = vmatprep.subr.bf16.mxu0 %v1352
    %1948 = vmatpush2.bf16.msra.mxu0 %v1351
    %1949 = vmatprep.subr.bf16.mxu0 %v1348
    %1950 = vmatpush2.bf16.msra.mxu0 %v1347
    %1951 = vmatprep.subr.bf16.mxu0 %v1344
    %1952 = vmatpush2.bf16.msra.mxu0 %v1343
    %1953 = vmatprep.subr.bf16.mxu0 %v1340
    %1954 = vmatpush2.bf16.msra.mxu0 %v1339
    %1955 = vmatprep.subr.bf16.mxu0 %v1336
    %1956 = vmatpush2.bf16.msra.mxu0 %v1335
    %1957 = vmatprep.subr.bf16.mxu0 %v1332
    %1958 = vmatpush2.bf16.msra.mxu0 %v1331
    %1959 = vmatprep.subr.bf16.mxu0 %v1328
    %1960 = vmatpush2.bf16.msra.mxu0 %v1327
    %1961 = vmatprep.subr.bf16.mxu0 %v1324
    %1962 = vmatpush2.bf16.msra.mxu0 %v1323
    %1963 = vmatprep.mubr.bf16.mxu0 %v112
    %1964 = vmatmul.mubr.bf16.gmra.mxu0 %v111
    %v1965 = vpop.f32.mrf.mxu0
    %v1966 = vadd.f32 %v1923, %v1965
    %v1967 = vpop.f32.mrf.mxu0
    %v1968 = vadd.f32 %v1925, %v1967
    %v1969 = vpop.f32.mrf.mxu0
    %v1970 = vadd.f32 %v1927, %v1969
    %v1971 = vpop.f32.mrf.mxu0
    %v1972 = vadd.f32 %v1929, %v1971
    %1973 = vdwg.mxu0
    %1974 = vmatprep.subr.bf16.mxu0 %v1384
    %1975 = vmatpush1.bf16.msra.mxu0 %v1383
    %1976 = vmatprep.subr.bf16.mxu0 %v1380
    %1977 = vmatpush1.bf16.msra.mxu0 %v1379
    %1978 = vmatprep.subr.bf16.mxu0 %v1376
    %1979 = vmatpush1.bf16.msra.mxu0 %v1375
    %1980 = vmatprep.subr.bf16.mxu0 %v1372
    %1981 = vmatpush1.bf16.msra.mxu0 %v1371
    %1982 = vmatprep.subr.bf16.mxu0 %v1368
    %1983 = vmatpush1.bf16.msra.mxu0 %v1367
    %1984 = vmatprep.subr.bf16.mxu0 %v1364
    %1985 = vmatpush1.bf16.msra.mxu0 %v1363
    %1986 = vmatprep.subr.bf16.mxu0 %v1360
    %1987 = vmatpush1.bf16.msra.mxu0 %v1359
    %1988 = vmatprep.subr.bf16.mxu0 %v1356
    %1989 = vmatpush1.bf16.msra.mxu0 %v1355
    %1990 = vmatprep.subr.bf16.mxu0 %v1416
    %1991 = vmatpush2.bf16.msra.mxu0 %v1415
    %1992 = vmatprep.subr.bf16.mxu0 %v1412
    %1993 = vmatpush2.bf16.msra.mxu0 %v1411
    %1994 = vmatprep.subr.bf16.mxu0 %v1408
    %1995 = vmatpush2.bf16.msra.mxu0 %v1407
    %1996 = vmatprep.subr.bf16.mxu0 %v1404
    %1997 = vmatpush2.bf16.msra.mxu0 %v1403
    %1998 = vmatprep.subr.bf16.mxu0 %v1400
    %1999 = vmatpush2.bf16.msra.mxu0 %v1399
    %2000 = vmatprep.subr.bf16.mxu0 %v1396
    %2001 = vmatpush2.bf16.msra.mxu0 %v1395
    %2002 = vmatprep.subr.bf16.mxu0 %v1392
    %2003 = vmatpush2.bf16.msra.mxu0 %v1391
    %2004 = vmatprep.subr.bf16.mxu0 %v1388
    %2005 = vmatpush2.bf16.msra.mxu0 %v1387
    %2006 = vmatprep.mubr.bf16.mxu0 %v114
    %2007 = vmatmul.mubr.bf16.gmra.mxu0 %v113
    %v2008 = vpop.f32.mrf.mxu0
    %v2009 = vadd.f32 %v1966, %v2008
    %v2010 = vpop.f32.mrf.mxu0
    %v2011 = vadd.f32 %v1968, %v2010
    %v2012 = vpop.f32.mrf.mxu0
    %v2013 = vadd.f32 %v1970, %v2012
    %v2014 = vpop.f32.mrf.mxu0
    %v2015 = vadd.f32 %v1972, %v2014
    %2016 = vdwg.mxu0
    %v2017 = vmul.f32 %v1837, 0.2
    %v2018 = vmul.f32 %v1839, 0.2
    %v2019 = vmul.f32 %v2009, 0.2
    %v2020 = vmul.f32 %v2011, 0.2
    %v2021 = vmul.f32 %v1841, 0.2
    %v2022 = vmul.f32 %v1843, 0.2
    %v2023 = vmul.f32 %v2013, 0.2
    %v2024 = vmul.f32 %v2015, 0.2
    %v2025 = vmax.f32 %v1837, %v2017
    %v2026 = vmax.f32 %v1839, %v2018
    %v2027 = vmax.f32 %v2009, %v2019
    %v2028 = vmax.f32 %v2011, %v2020
    %v2029 = vmax.f32 %v1841, %v2021
    %v2030 = vmax.f32 %v1843, %v2022
    %v2031 = vmax.f32 %v2013, %v2023
    %v2032 = vmax.f32 %v2015, %v2024
    %v2033 = vpack.c.bf16 %v2029, %v2025
    %v2034 = vpack.c.bf16 %v2030, %v2026
    %v2035 = vpack.c.bf16 %v2031, %v2027
    %v2036 = vpack.c.bf16 %v2032, %v2028
    %v2037 = vld [vmem:[#allocation8] sm:$0xff]
    %v2038 = vld [vmem:[#allocation8 + $0x8] sm:$0xff]
    %v2039 = vld [vmem:[#allocation8 + $0x10] sm:$0xff]
    %v2040 = vld [vmem:[#allocation8 + $0x18] sm:$0xff]
    %v2041 = vld [vmem:[#allocation8 + $0x20] sm:$0xff]
    %v2042 = vld [vmem:[#allocation8 + $0x28] sm:$0xff]
    %v2043 = vld [vmem:[#allocation8 + $0x30] sm:$0xff]
    %v2044 = vld [vmem:[#allocation8 + $0x38] sm:$0xff]
    %v2045 = vld [vmem:[#allocation8 + $0x40] sm:$0xff]
    %v2046 = vld [vmem:[#allocation8 + $0x48] sm:$0xff]
    %v2047 = vld [vmem:[#allocation8 + $0x50] sm:$0xff]
    %v2048 = vld [vmem:[#allocation8 + $0x58] sm:$0xff]
    %v2049 = vld [vmem:[#allocation8 + $0x60] sm:$0xff]
    %v2050 = vld [vmem:[#allocation8 + $0x68] sm:$0xff]
    %v2051 = vld [vmem:[#allocation8 + $0x70] sm:$0xff]
    %v2052 = vld [vmem:[#allocation8 + $0x78] sm:$0xff]
    %v2053 = vld [vmem:[#allocation8 + $0x80] sm:$0xff]
    %v2054 = vld [vmem:[#allocation8 + $0x88] sm:$0xff]
    %v2055 = vld [vmem:[#allocation8 + $0x90] sm:$0xff]
    %v2056 = vld [vmem:[#allocation8 + $0x98] sm:$0xff]
    %v2057 = vld [vmem:[#allocation8 + $0xa0] sm:$0xff]
    %v2058 = vld [vmem:[#allocation8 + $0xa8] sm:$0xff]
    %v2059 = vld [vmem:[#allocation8 + $0xb0] sm:$0xff]
    %v2060 = vld [vmem:[#allocation8 + $0xb8] sm:$0xff]
    %v2061 = vld [vmem:[#allocation8 + $0xc0] sm:$0xff]
    %v2062 = vld [vmem:[#allocation8 + $0xc8] sm:$0xff]
    %v2063 = vld [vmem:[#allocation8 + $0xd0] sm:$0xff]
    %v2064 = vld [vmem:[#allocation8 + $0xd8] sm:$0xff]
    %v2065 = vld [vmem:[#allocation8 + $0xe0] sm:$0xff]
    %v2066 = vld [vmem:[#allocation8 + $0xe8] sm:$0xff]
    %v2067 = vld [vmem:[#allocation8 + $0xf0] sm:$0xff]
    %v2068 = vld [vmem:[#allocation8 + $0xf8] sm:$0xff]
    %v2069 = vld [vmem:[#allocation8 + $0x100] sm:$0xff]
    %v2070 = vld [vmem:[#allocation8 + $0x108] sm:$0xff]
    %v2071 = vld [vmem:[#allocation8 + $0x110] sm:$0xff]
    %v2072 = vld [vmem:[#allocation8 + $0x118] sm:$0xff]
    %v2073 = vld [vmem:[#allocation8 + $0x120] sm:$0xff]
    %v2074 = vld [vmem:[#allocation8 + $0x128] sm:$0xff]
    %v2075 = vld [vmem:[#allocation8 + $0x130] sm:$0xff]
    %v2076 = vld [vmem:[#allocation8 + $0x138] sm:$0xff]
    %v2077 = vld [vmem:[#allocation8 + $0x140] sm:$0xff]
    %v2078 = vld [vmem:[#allocation8 + $0x148] sm:$0xff]
    %v2079 = vld [vmem:[#allocation8 + $0x150] sm:$0xff]
    %v2080 = vld [vmem:[#allocation8 + $0x158] sm:$0xff]
    %v2081 = vld [vmem:[#allocation8 + $0x160] sm:$0xff]
    %v2082 = vld [vmem:[#allocation8 + $0x168] sm:$0xff]
    %v2083 = vld [vmem:[#allocation8 + $0x170] sm:$0xff]
    %v2084 = vld [vmem:[#allocation8 + $0x178] sm:$0xff]
    %v2085 = vld [vmem:[#allocation8 + $0x180] sm:$0xff]
    %v2086 = vld [vmem:[#allocation8 + $0x188] sm:$0xff]
    %v2087 = vld [vmem:[#allocation8 + $0x190] sm:$0xff]
    %v2088 = vld [vmem:[#allocation8 + $0x198] sm:$0xff]
    %v2089 = vld [vmem:[#allocation8 + $0x1a0] sm:$0xff]
    %v2090 = vld [vmem:[#allocation8 + $0x1a8] sm:$0xff]
    %v2091 = vld [vmem:[#allocation8 + $0x1b0] sm:$0xff]
    %v2092 = vld [vmem:[#allocation8 + $0x1b8] sm:$0xff]
    %v2093 = vld [vmem:[#allocation8 + $0x1c0] sm:$0xff]
    %v2094 = vld [vmem:[#allocation8 + $0x1c8] sm:$0xff]
    %v2095 = vld [vmem:[#allocation8 + $0x1d0] sm:$0xff]
    %v2096 = vld [vmem:[#allocation8 + $0x1d8] sm:$0xff]
    %v2097 = vld [vmem:[#allocation8 + $0x1e0] sm:$0xff]
    %v2098 = vld [vmem:[#allocation8 + $0x1e8] sm:$0xff]
    %v2099 = vld [vmem:[#allocation8 + $0x1f0] sm:$0xff]
    %v2100 = vld [vmem:[#allocation8 + $0x1f8] sm:$0xff]
    %v2101 = vld [vmem:[%s4] sm:$0x3]
    %v2103 = vlaneseq
    %v2104 = vshrl.u32 %v2103, 7
    %v2105 = vsub.s32 0, %v2104
    %v2106 = vrot.slane %v2101, %v2105
    %v2107 = vlaneseq
    %v2108 = vshrl.u32 %v2107, 7
    %v2109 = vsub.s32 1, %v2108
    %v2110 = vrot.slane %v2101, %v2109
    %v2177 = vunpack.c.l.b16 %v2037
    %v2178 = vunpack.c.h.b16 %v2037
    %v2179 = vunpack.c.l.b16 %v2038
    %v2180 = vunpack.c.h.b16 %v2038
    %v2181 = vunpack.c.l.b16 %v2039
    %v2182 = vunpack.c.h.b16 %v2039
    %v2183 = vunpack.c.l.b16 %v2040
    %v2184 = vunpack.c.h.b16 %v2040
    %v2185 = vunpack.c.l.b16 %v2041
    %v2186 = vunpack.c.h.b16 %v2041
    %v2187 = vunpack.c.l.b16 %v2042
    %v2188 = vunpack.c.h.b16 %v2042
    %v2189 = vunpack.c.l.b16 %v2043
    %v2190 = vunpack.c.h.b16 %v2043
    %v2191 = vunpack.c.l.b16 %v2044
    %v2192 = vunpack.c.h.b16 %v2044
    %v2193 = vunpack.c.l.b16 %v2045
    %v2194 = vunpack.c.h.b16 %v2045
    %v2195 = vunpack.c.l.b16 %v2046
    %v2196 = vunpack.c.h.b16 %v2046
    %v2197 = vunpack.c.l.b16 %v2047
    %v2198 = vunpack.c.h.b16 %v2047
    %v2199 = vunpack.c.l.b16 %v2048
    %v2200 = vunpack.c.h.b16 %v2048
    %v2201 = vunpack.c.l.b16 %v2049
    %v2202 = vunpack.c.h.b16 %v2049
    %v2203 = vunpack.c.l.b16 %v2050
    %v2204 = vunpack.c.h.b16 %v2050
    %v2205 = vunpack.c.l.b16 %v2051
    %v2206 = vunpack.c.h.b16 %v2051
    %v2207 = vunpack.c.l.b16 %v2052
    %v2208 = vunpack.c.h.b16 %v2052
    %v2209 = vunpack.c.l.b16 %v2053
    %v2210 = vunpack.c.h.b16 %v2053
    %v2211 = vunpack.c.l.b16 %v2054
    %v2212 = vunpack.c.h.b16 %v2054
    %v2213 = vunpack.c.l.b16 %v2055
    %v2214 = vunpack.c.h.b16 %v2055
    %v2215 = vunpack.c.l.b16 %v2056
    %v2216 = vunpack.c.h.b16 %v2056
    %v2217 = vunpack.c.l.b16 %v2057
    %v2218 = vunpack.c.h.b16 %v2057
    %v2219 = vunpack.c.l.b16 %v2058
    %v2220 = vunpack.c.h.b16 %v2058
    %v2221 = vunpack.c.l.b16 %v2059
    %v2222 = vunpack.c.h.b16 %v2059
    %v2223 = vunpack.c.l.b16 %v2060
    %v2224 = vunpack.c.h.b16 %v2060
    %v2225 = vunpack.c.l.b16 %v2061
    %v2226 = vunpack.c.h.b16 %v2061
    %v2227 = vunpack.c.l.b16 %v2062
    %v2228 = vunpack.c.h.b16 %v2062
    %v2229 = vunpack.c.l.b16 %v2063
    %v2230 = vunpack.c.h.b16 %v2063
    %v2231 = vunpack.c.l.b16 %v2064
    %v2232 = vunpack.c.h.b16 %v2064
    %v2233 = vunpack.c.l.b16 %v2065
    %v2234 = vunpack.c.h.b16 %v2065
    %v2235 = vunpack.c.l.b16 %v2066
    %v2236 = vunpack.c.h.b16 %v2066
    %v2237 = vunpack.c.l.b16 %v2067
    %v2238 = vunpack.c.h.b16 %v2067
    %v2239 = vunpack.c.l.b16 %v2068
    %v2240 = vunpack.c.h.b16 %v2068
    %v2241 = vunpack.c.l.b16 %v2069
    %v2242 = vunpack.c.h.b16 %v2069
    %v2243 = vunpack.c.l.b16 %v2070
    %v2244 = vunpack.c.h.b16 %v2070
    %v2245 = vunpack.c.l.b16 %v2071
    %v2246 = vunpack.c.h.b16 %v2071
    %v2247 = vunpack.c.l.b16 %v2072
    %v2248 = vunpack.c.h.b16 %v2072
    %v2249 = vunpack.c.l.b16 %v2073
    %v2250 = vunpack.c.h.b16 %v2073
    %v2251 = vunpack.c.l.b16 %v2074
    %v2252 = vunpack.c.h.b16 %v2074
    %v2253 = vunpack.c.l.b16 %v2075
    %v2254 = vunpack.c.h.b16 %v2075
    %v2255 = vunpack.c.l.b16 %v2076
    %v2256 = vunpack.c.h.b16 %v2076
    %v2257 = vunpack.c.l.b16 %v2077
    %v2258 = vunpack.c.h.b16 %v2077
    %v2259 = vunpack.c.l.b16 %v2078
    %v2260 = vunpack.c.h.b16 %v2078
    %v2261 = vunpack.c.l.b16 %v2079
    %v2262 = vunpack.c.h.b16 %v2079
    %v2263 = vunpack.c.l.b16 %v2080
    %v2264 = vunpack.c.h.b16 %v2080
    %v2265 = vunpack.c.l.b16 %v2081
    %v2266 = vunpack.c.h.b16 %v2081
    %v2267 = vunpack.c.l.b16 %v2082
    %v2268 = vunpack.c.h.b16 %v2082
    %v2269 = vunpack.c.l.b16 %v2083
    %v2270 = vunpack.c.h.b16 %v2083
    %v2271 = vunpack.c.l.b16 %v2084
    %v2272 = vunpack.c.h.b16 %v2084
    %v2273 = vunpack.c.l.b16 %v2085
    %v2274 = vunpack.c.h.b16 %v2085
    %v2275 = vunpack.c.l.b16 %v2086
    %v2276 = vunpack.c.h.b16 %v2086
    %v2277 = vunpack.c.l.b16 %v2087
    %v2278 = vunpack.c.h.b16 %v2087
    %v2279 = vunpack.c.l.b16 %v2088
    %v2280 = vunpack.c.h.b16 %v2088
    %v2281 = vunpack.c.l.b16 %v2089
    %v2282 = vunpack.c.h.b16 %v2089
    %v2283 = vunpack.c.l.b16 %v2090
    %v2284 = vunpack.c.h.b16 %v2090
    %v2285 = vunpack.c.l.b16 %v2091
    %v2286 = vunpack.c.h.b16 %v2091
    %v2287 = vunpack.c.l.b16 %v2092
    %v2288 = vunpack.c.h.b16 %v2092
    %v2289 = vunpack.c.l.b16 %v2093
    %v2290 = vunpack.c.h.b16 %v2093
    %v2291 = vunpack.c.l.b16 %v2094
    %v2292 = vunpack.c.h.b16 %v2094
    %v2293 = vunpack.c.l.b16 %v2095
    %v2294 = vunpack.c.h.b16 %v2095
    %v2295 = vunpack.c.l.b16 %v2096
    %v2296 = vunpack.c.h.b16 %v2096
    %v2297 = vunpack.c.l.b16 %v2097
    %v2298 = vunpack.c.h.b16 %v2097
    %v2299 = vunpack.c.l.b16 %v2098
    %v2300 = vunpack.c.h.b16 %v2098
    %v2301 = vunpack.c.l.b16 %v2099
    %v2302 = vunpack.c.h.b16 %v2099
    %v2303 = vunpack.c.l.b16 %v2100
    %v2304 = vunpack.c.h.b16 %v2100
    %v2305 = vpack.c.b16 %v2179, %v2177
    %v2306 = vpack.c.b16 %v2180, %v2178
    %v2307 = vpack.c.b16 %v2183, %v2181
    %v2308 = vpack.c.b16 %v2184, %v2182
    %v2309 = vpack.c.b16 %v2187, %v2185
    %v2310 = vpack.c.b16 %v2188, %v2186
    %v2311 = vpack.c.b16 %v2191, %v2189
    %v2312 = vpack.c.b16 %v2192, %v2190
    %v2313 = vpack.c.b16 %v2195, %v2193
    %v2314 = vpack.c.b16 %v2196, %v2194
    %v2315 = vpack.c.b16 %v2199, %v2197
    %v2316 = vpack.c.b16 %v2200, %v2198
    %v2317 = vpack.c.b16 %v2203, %v2201
    %v2318 = vpack.c.b16 %v2204, %v2202
    %v2319 = vpack.c.b16 %v2207, %v2205
    %v2320 = vpack.c.b16 %v2208, %v2206
    %v2321 = vpack.c.b16 %v2211, %v2209
    %v2322 = vpack.c.b16 %v2212, %v2210
    %v2323 = vpack.c.b16 %v2215, %v2213
    %v2324 = vpack.c.b16 %v2216, %v2214
    %v2325 = vpack.c.b16 %v2219, %v2217
    %v2326 = vpack.c.b16 %v2220, %v2218
    %v2327 = vpack.c.b16 %v2223, %v2221
    %v2328 = vpack.c.b16 %v2224, %v2222
    %v2329 = vpack.c.b16 %v2227, %v2225
    %v2330 = vpack.c.b16 %v2228, %v2226
    %v2331 = vpack.c.b16 %v2231, %v2229
    %v2332 = vpack.c.b16 %v2232, %v2230
    %v2333 = vpack.c.b16 %v2235, %v2233
    %v2334 = vpack.c.b16 %v2236, %v2234
    %v2335 = vpack.c.b16 %v2239, %v2237
    %v2336 = vpack.c.b16 %v2240, %v2238
    %v2337 = vpack.c.b16 %v2243, %v2241
    %v2338 = vpack.c.b16 %v2244, %v2242
    %v2339 = vpack.c.b16 %v2247, %v2245
    %v2340 = vpack.c.b16 %v2248, %v2246
    %v2341 = vpack.c.b16 %v2251, %v2249
    %v2342 = vpack.c.b16 %v2252, %v2250
    %v2343 = vpack.c.b16 %v2255, %v2253
    %v2344 = vpack.c.b16 %v2256, %v2254
    %v2345 = vpack.c.b16 %v2259, %v2257
    %v2346 = vpack.c.b16 %v2260, %v2258
    %v2347 = vpack.c.b16 %v2263, %v2261
    %v2348 = vpack.c.b16 %v2264, %v2262
    %v2349 = vpack.c.b16 %v2267, %v2265
    %v2350 = vpack.c.b16 %v2268, %v2266
    %v2351 = vpack.c.b16 %v2271, %v2269
    %v2352 = vpack.c.b16 %v2272, %v2270
    %v2353 = vpack.c.b16 %v2275, %v2273
    %v2354 = vpack.c.b16 %v2276, %v2274
    %v2355 = vpack.c.b16 %v2279, %v2277
    %v2356 = vpack.c.b16 %v2280, %v2278
    %v2357 = vpack.c.b16 %v2283, %v2281
    %v2358 = vpack.c.b16 %v2284, %v2282
    %v2359 = vpack.c.b16 %v2287, %v2285
    %v2360 = vpack.c.b16 %v2288, %v2286
    %v2361 = vpack.c.b16 %v2291, %v2289
    %v2362 = vpack.c.b16 %v2292, %v2290
    %v2363 = vpack.c.b16 %v2295, %v2293
    %v2364 = vpack.c.b16 %v2296, %v2294
    %v2365 = vpack.c.b16 %v2299, %v2297
    %v2366 = vpack.c.b16 %v2300, %v2298
    %v2367 = vpack.c.b16 %v2303, %v2301
    %v2368 = vpack.c.b16 %v2304, %v2302
    %2433 = vmatprep.subr.bf16.mxu0 %v2320
    %2434 = vmatpush1.bf16.msra.mxu0 %v2319
    %2435 = vmatprep.subr.bf16.mxu0 %v2318
    %2436 = vmatpush1.bf16.msra.mxu0 %v2317
    %2437 = vmatprep.subr.bf16.mxu0 %v2316
    %2438 = vmatpush1.bf16.msra.mxu0 %v2315
    %2439 = vmatprep.subr.bf16.mxu0 %v2314
    %2440 = vmatpush1.bf16.msra.mxu0 %v2313
    %2441 = vmatprep.subr.bf16.mxu0 %v2312
    %2442 = vmatpush1.bf16.msra.mxu0 %v2311
    %2443 = vmatprep.subr.bf16.mxu0 %v2310
    %2444 = vmatpush1.bf16.msra.mxu0 %v2309
    %2445 = vmatprep.subr.bf16.mxu0 %v2308
    %2446 = vmatpush1.bf16.msra.mxu0 %v2307
    %2447 = vmatprep.subr.bf16.mxu0 %v2306
    %2448 = vmatpush1.bf16.msra.mxu0 %v2305
    %2449 = vmatprep.subr.bf16.mxu0 %v2336
    %2450 = vmatpush2.bf16.msra.mxu0 %v2335
    %2451 = vmatprep.subr.bf16.mxu0 %v2334
    %2452 = vmatpush2.bf16.msra.mxu0 %v2333
    %2453 = vmatprep.subr.bf16.mxu0 %v2332
    %2454 = vmatpush2.bf16.msra.mxu0 %v2331
    %2455 = vmatprep.subr.bf16.mxu0 %v2330
    %2456 = vmatpush2.bf16.msra.mxu0 %v2329
    %2457 = vmatprep.subr.bf16.mxu0 %v2328
    %2458 = vmatpush2.bf16.msra.mxu0 %v2327
    %2459 = vmatprep.subr.bf16.mxu0 %v2326
    %2460 = vmatpush2.bf16.msra.mxu0 %v2325
    %2461 = vmatprep.subr.bf16.mxu0 %v2324
    %2462 = vmatpush2.bf16.msra.mxu0 %v2323
    %2463 = vmatprep.subr.bf16.mxu0 %v2322
    %2464 = vmatpush2.bf16.msra.mxu0 %v2321
    %2465 = vmatprep.mubr.bf16.mxu0 %v2034
    %2466 = vmatmul.mubr.bf16.gmra.mxu0 %v2033
    %v2467 = vpop.f32.mrf.mxu0
    %v2468 = vadd.f32 %v2106, %v2467
    %v2469 = vpop.f32.mrf.mxu0
    %v2470 = vadd.f32 %v2110, %v2469
    %v2471 = vpop.f32.mrf.mxu0
    %v2472 = vadd.f32 %v2106, %v2471
    %v2473 = vpop.f32.mrf.mxu0
    %v2474 = vadd.f32 %v2110, %v2473
    %2475 = vdwg.mxu0
    %2476 = vmatprep.subr.bf16.mxu0 %v2352
    %2477 = vmatpush1.bf16.msra.mxu0 %v2351
    %2478 = vmatprep.subr.bf16.mxu0 %v2350
    %2479 = vmatpush1.bf16.msra.mxu0 %v2349
    %2480 = vmatprep.subr.bf16.mxu0 %v2348
    %2481 = vmatpush1.bf16.msra.mxu0 %v2347
    %2482 = vmatprep.subr.bf16.mxu0 %v2346
    %2483 = vmatpush1.bf16.msra.mxu0 %v2345
    %2484 = vmatprep.subr.bf16.mxu0 %v2344
    %2485 = vmatpush1.bf16.msra.mxu0 %v2343
    %2486 = vmatprep.subr.bf16.mxu0 %v2342
    %2487 = vmatpush1.bf16.msra.mxu0 %v2341
    %2488 = vmatprep.subr.bf16.mxu0 %v2340
    %2489 = vmatpush1.bf16.msra.mxu0 %v2339
    %2490 = vmatprep.subr.bf16.mxu0 %v2338
    %2491 = vmatpush1.bf16.msra.mxu0 %v2337
    %2492 = vmatprep.subr.bf16.mxu0 %v2368
    %2493 = vmatpush2.bf16.msra.mxu0 %v2367
    %2494 = vmatprep.subr.bf16.mxu0 %v2366
    %2495 = vmatpush2.bf16.msra.mxu0 %v2365
    %2496 = vmatprep.subr.bf16.mxu0 %v2364
    %2497 = vmatpush2.bf16.msra.mxu0 %v2363
    %2498 = vmatprep.subr.bf16.mxu0 %v2362
    %2499 = vmatpush2.bf16.msra.mxu0 %v2361
    %2500 = vmatprep.subr.bf16.mxu0 %v2360
    %2501 = vmatpush2.bf16.msra.mxu0 %v2359
    %2502 = vmatprep.subr.bf16.mxu0 %v2358
    %2503 = vmatpush2.bf16.msra.mxu0 %v2357
    %2504 = vmatprep.subr.bf16.mxu0 %v2356
    %2505 = vmatpush2.bf16.msra.mxu0 %v2355
    %2506 = vmatprep.subr.bf16.mxu0 %v2354
    %2507 = vmatpush2.bf16.msra.mxu0 %v2353
    %2508 = vmatprep.mubr.bf16.mxu0 %v2036
    %2509 = vmatmul.mubr.bf16.gmra.mxu0 %v2035
    %v2510 = vpop.f32.mrf.mxu0
    %v2511 = vadd.f32 %v2468, %v2510
    %v2512 = vpop.f32.mrf.mxu0
    %v2513 = vadd.f32 %v2470, %v2512
    %v2514 = vpop.f32.mrf.mxu0
    %v2515 = vadd.f32 %v2472, %v2514
    %v2516 = vpop.f32.mrf.mxu0
    %v2517 = vadd.f32 %v2474, %v2516
    %2518 = vdwg.mxu0
    %v2519 = vmul.f32 %v2511, 0.2
    %v2520 = vmul.f32 %v2513, 0.2
    %v2521 = vmul.f32 %v2515, 0.2
    %v2522 = vmul.f32 %v2517, 0.2
    %v2523 = vmax.f32 %v2511, %v2519
    %v2524 = vmax.f32 %v2513, %v2520
    %v2525 = vmax.f32 %v2515, %v2521
    %v2526 = vmax.f32 %v2517, %v2522
    %v2527 = vpack.c.bf16 %v2525, %v2523
    %v2528 = vpack.c.bf16 %v2526, %v2524
    %v2529 = vld [vmem:[#allocation9] sm:$0xf]
    %v2530 = vld [vmem:[#allocation9 + $0x4] sm:$0xf]
    %v2531 = vld [vmem:[#allocation9 + $0x8] sm:$0xf]
    %v2532 = vld [vmem:[#allocation9 + $0xc] sm:$0xf]
    %v2533 = vld [vmem:[#allocation9 + $0x10] sm:$0xf]
    %v2534 = vld [vmem:[#allocation9 + $0x14] sm:$0xf]
    %v2535 = vld [vmem:[#allocation9 + $0x18] sm:$0xf]
    %v2536 = vld [vmem:[#allocation9 + $0x1c] sm:$0xf]
    %v2537 = vld [vmem:[#allocation9 + $0x20] sm:$0xf]
    %v2538 = vld [vmem:[#allocation9 + $0x24] sm:$0xf]
    %v2539 = vld [vmem:[#allocation9 + $0x28] sm:$0xf]
    %v2540 = vld [vmem:[#allocation9 + $0x2c] sm:$0xf]
    %v2541 = vld [vmem:[#allocation9 + $0x30] sm:$0xf]
    %v2542 = vld [vmem:[#allocation9 + $0x34] sm:$0xf]
    %v2543 = vld [vmem:[#allocation9 + $0x38] sm:$0xf]
    %v2544 = vld [vmem:[#allocation9 + $0x3c] sm:$0xf]
    %v2545 = vld [vmem:[#allocation9 + $0x40] sm:$0xf]
    %v2546 = vld [vmem:[#allocation9 + $0x44] sm:$0xf]
    %v2547 = vld [vmem:[#allocation9 + $0x48] sm:$0xf]
    %v2548 = vld [vmem:[#allocation9 + $0x4c] sm:$0xf]
    %v2549 = vld [vmem:[#allocation9 + $0x50] sm:$0xf]
    %v2550 = vld [vmem:[#allocation9 + $0x54] sm:$0xf]
    %v2551 = vld [vmem:[#allocation9 + $0x58] sm:$0xf]
    %v2552 = vld [vmem:[#allocation9 + $0x5c] sm:$0xf]
    %v2553 = vld [vmem:[#allocation9 + $0x60] sm:$0xf]
    %v2554 = vld [vmem:[#allocation9 + $0x64] sm:$0xf]
    %v2555 = vld [vmem:[#allocation9 + $0x68] sm:$0xf]
    %v2556 = vld [vmem:[#allocation9 + $0x6c] sm:$0xf]
    %v2557 = vld [vmem:[#allocation9 + $0x70] sm:$0xf]
    %v2558 = vld [vmem:[#allocation9 + $0x74] sm:$0xf]
    %v2559 = vld [vmem:[#allocation9 + $0x78] sm:$0xf]
    %v2560 = vld [vmem:[#allocation9 + $0x7c] sm:$0xf]
    %v2561 = vld [vmem:[%s6] sm:$0x1]
    %v2563 = vlaneseq
    %v2564 = vshrl.u32 %v2563, 7
    %v2565 = vsub.s32 0, %v2564
    %v2566 = vrot.slane %v2561, %v2565
    %v2600 = vunpack.c.l.b16 %v2529
    %v2601 = vunpack.c.l.b16 %v2530
    %v2602 = vunpack.c.l.b16 %v2531
    %v2603 = vunpack.c.l.b16 %v2532
    %v2604 = vunpack.c.l.b16 %v2533
    %v2605 = vunpack.c.l.b16 %v2534
    %v2606 = vunpack.c.l.b16 %v2535
    %v2607 = vunpack.c.l.b16 %v2536
    %v2608 = vunpack.c.l.b16 %v2537
    %v2609 = vunpack.c.l.b16 %v2538
    %v2610 = vunpack.c.l.b16 %v2539
    %v2611 = vunpack.c.l.b16 %v2540
    %v2612 = vunpack.c.l.b16 %v2541
    %v2613 = vunpack.c.l.b16 %v2542
    %v2614 = vunpack.c.l.b16 %v2543
    %v2615 = vunpack.c.l.b16 %v2544
    %v2616 = vunpack.c.l.b16 %v2545
    %v2617 = vunpack.c.l.b16 %v2546
    %v2618 = vunpack.c.l.b16 %v2547
    %v2619 = vunpack.c.l.b16 %v2548
    %v2620 = vunpack.c.l.b16 %v2549
    %v2621 = vunpack.c.l.b16 %v2550
    %v2622 = vunpack.c.l.b16 %v2551
    %v2623 = vunpack.c.l.b16 %v2552
    %v2624 = vunpack.c.l.b16 %v2553
    %v2625 = vunpack.c.l.b16 %v2554
    %v2626 = vunpack.c.l.b16 %v2555
    %v2627 = vunpack.c.l.b16 %v2556
    %v2628 = vunpack.c.l.b16 %v2557
    %v2629 = vunpack.c.l.b16 %v2558
    %v2630 = vunpack.c.l.b16 %v2559
    %v2631 = vunpack.c.l.b16 %v2560
    %v2632 = vpack.c.b16 %v2601, %v2600
    %v2633 = vpack.c.b16 %v2603, %v2602
    %v2634 = vpack.c.b16 %v2605, %v2604
    %v2635 = vpack.c.b16 %v2607, %v2606
    %v2636 = vpack.c.b16 %v2609, %v2608
    %v2637 = vpack.c.b16 %v2611, %v2610
    %v2638 = vpack.c.b16 %v2613, %v2612
    %v2639 = vpack.c.b16 %v2615, %v2614
    %v2640 = vpack.c.b16 %v2617, %v2616
    %v2641 = vpack.c.b16 %v2619, %v2618
    %v2642 = vpack.c.b16 %v2621, %v2620
    %v2643 = vpack.c.b16 %v2623, %v2622
    %v2644 = vpack.c.b16 %v2625, %v2624
    %v2645 = vpack.c.b16 %v2627, %v2626
    %v2646 = vpack.c.b16 %v2629, %v2628
    %v2647 = vpack.c.b16 %v2631, %v2630
    %2664 = vmatprep.subr.bf16.mxu0 0
    %2665 = vmatpush1.bf16.msra.mxu0 %v2639
    %2666 = vmatprep.subr.bf16.mxu0 0
    %2667 = vmatpush1.bf16.msra.mxu0 %v2638
    %2668 = vmatprep.subr.bf16.mxu0 0
    %2669 = vmatpush1.bf16.msra.mxu0 %v2637
    %2670 = vmatprep.subr.bf16.mxu0 0
    %2671 = vmatpush1.bf16.msra.mxu0 %v2636
    %2672 = vmatprep.subr.bf16.mxu0 0
    %2673 = vmatpush1.bf16.msra.mxu0 %v2635
    %2674 = vmatprep.subr.bf16.mxu0 0
    %2675 = vmatpush1.bf16.msra.mxu0 %v2634
    %2676 = vmatprep.subr.bf16.mxu0 0
    %2677 = vmatpush1.bf16.msra.mxu0 %v2633
    %2678 = vmatprep.subr.bf16.mxu0 0
    %2679 = vmatpush1.bf16.msra.mxu0 %v2632
    %2680 = vmatprep.subr.bf16.mxu0 0
    %2681 = vmatpush2.bf16.msra.mxu0 %v2647
    %2682 = vmatprep.subr.bf16.mxu0 0
    %2683 = vmatpush2.bf16.msra.mxu0 %v2646
    %2684 = vmatprep.subr.bf16.mxu0 0
    %2685 = vmatpush2.bf16.msra.mxu0 %v2645
    %2686 = vmatprep.subr.bf16.mxu0 0
    %2687 = vmatpush2.bf16.msra.mxu0 %v2644
    %2688 = vmatprep.subr.bf16.mxu0 0
    %2689 = vmatpush2.bf16.msra.mxu0 %v2643
    %2690 = vmatprep.subr.bf16.mxu0 0
    %2691 = vmatpush2.bf16.msra.mxu0 %v2642
    %2692 = vmatprep.subr.bf16.mxu0 0
    %2693 = vmatpush2.bf16.msra.mxu0 %v2641
    %2694 = vmatprep.subr.bf16.mxu0 0
    %2695 = vmatpush2.bf16.msra.mxu0 %v2640
    %2696 = vmatprep.mubr.bf16.mxu0 %v2528
    %2697 = vmatmul.mubr.bf16.gmra.mxu0 %v2527
    %v2698 = vpop.f32.mrf.mxu0
    %v2699 = vadd.f32 %v2566, %v2698
    %v2700 = vpop.f32.mrf.mxu0
    %v2701 = vpop.f32.mrf.mxu0
    %v2702 = vadd.f32 %v2566, %v2701
    %v2703 = vpop.f32.mrf.mxu0
    %2704 = vdwg.mxu0
    %v2705 = vmul.f32 %v2699, 0.2
    %v2706 = vmul.f32 %v2702, 0.2
    %v2707 = vmax.f32 %v2699, %v2705
    %v2708 = vmax.f32 %v2702, %v2706
    %v2709 = vld [vmem:[%s7] sm:$0x1]
    %v2710 = vpack.c.bf16 %v2708, %v2707
    %v2711 = vld [vmem:[#allocation2] sm:$0x1]
    %2713 = vset.pattern.permute.xlu0 0
    %2714 = vperm.xlu0 %2713, %v2711
    %v2715 = vpop.permute.xlu0 %2714
    %v2717 = vlaneseq
    %v2718 = vshrl.u32 %v2717, 7
    %v2719 = vsub.s32 0, %v2718
    %v2720 = vrot.slane %v2715, %v2719
    %2721 = vmatprep.subr.bf16.mxu0 0
    %2722 = vmatpush1.bf16.xpose.msra.mxu0 0
    %2723 = vmatprep.subr.bf16.mxu0 0
    %2724 = vmatpush1.bf16.xpose.msra.mxu0 0
    %2725 = vmatprep.subr.bf16.mxu0 0
    %2726 = vmatpush1.bf16.xpose.msra.mxu0 0
    %2727 = vmatprep.subr.bf16.mxu0 0
    %2728 = vmatpush1.bf16.xpose.msra.mxu0 0
    %2729 = vmatprep.subr.bf16.mxu0 0
    %2730 = vmatpush1.bf16.xpose.msra.mxu0 0
    %2731 = vmatprep.subr.bf16.mxu0 0
    %2732 = vmatpush1.bf16.xpose.msra.mxu0 0
    %2733 = vmatprep.subr.bf16.mxu0 0
    %2734 = vmatpush1.bf16.xpose.msra.mxu0 0
    %2735 = vmatprep.subr.bf16.mxu0 0
    %2736 = vmatpush1.bf16.xpose.msra.mxu0 %v2710
    %2737 = vmatprep.subr.bf16.mxu0 0
    %2738 = vmatpush2.bf16.xpose.msra.mxu0 0
    %2739 = vmatprep.subr.bf16.mxu0 0
    %2740 = vmatpush2.bf16.xpose.msra.mxu0 0
    %2741 = vmatprep.subr.bf16.mxu0 0
    %2742 = vmatpush2.bf16.xpose.msra.mxu0 0
    %2743 = vmatprep.subr.bf16.mxu0 0
    %2744 = vmatpush2.bf16.xpose.msra.mxu0 0
    %2745 = vmatprep.subr.bf16.mxu0 0
    %2746 = vmatpush2.bf16.xpose.msra.mxu0 0
    %2747 = vmatprep.subr.bf16.mxu0 0
    %2748 = vmatpush2.bf16.xpose.msra.mxu0 0
    %2749 = vmatprep.subr.bf16.mxu0 0
    %2750 = vmatpush2.bf16.xpose.msra.mxu0 0
    %2751 = vmatprep.subr.bf16.mxu0 0
    %2752 = vmatpush2.bf16.xpose.msra.mxu0 0
    %2753 = vmatprep.mubr.bf16.mxu0 0
    %2754 = vmatmul.mubr.bf16.gmra.mxu0 %v2709
    %v2755 = vpop.f32.mrf.mxu0
    %v2756 = vadd.f32 %v2720, %v2755
    %v2757 = vpop.f32.mrf.mxu0
    %v2758 = vpop.f32.mrf.mxu0
    %v2759 = vpop.f32.mrf.mxu0
    %2760 = vdwg.mxu0
    %vm2761 = vcmask 122880
    %2762 = vst.msk [vmem:[#allocation11] sm:$0x1] %vm2761, %v2756
    // Predicated region
    $region54: #{tpu_custom_call.1} parent=1 // pred_check
      _
    $region55: #{tpu_custom_call.1} parent=1 // pred_check_branch
      %2764 = sbr.rel (0) target = $region57
    $region56: #{tpu_custom_call.1} parent=1 // pred_region
      %s2766 = ssub.s32 16, 16
      %2767 = vsyncadd [#allocation5], %s2766
      %s2769 = sshll.u32 [#allocation11], 4
      %s2770 = int_to_ptr.vmem [resolvable:$true] %s2769
      %2772 = dma.vmem_to_hbm [thread:$0]  %s2770, 16, %s9, [#allocation5]
    $region57: #{tpu_custom_call.1} parent=1 // pred_fallthru
      _
    // Predicated region
    $region58: #{tpu_custom_call.1} parent=1 // pred_check
      _
    $region59: #{tpu_custom_call.1} parent=1 // pred_check_branch
      %2774 = sbr.rel (0) target = $region61
    $region60: #{tpu_custom_call.1} parent=1 // pred_region
      %2775 = dma.done [#allocation5], 16
    $region61: #{tpu_custom_call.1} parent=1 // pred_fallthru
      _
    %2776 = vsyncpa [#allocation4], 1
    %2777 = vsyncpa [#allocation7], 1
    %2778 = vsyncpa [#allocation10], 1
    %2779 = vsyncpa [#allocation5], 1

</llo_original>
